<compile_context>
chip_gen: v6e
topology: v6e:2x2x1
jax: 0.10.0
libtpu: 0.0.40
codegen_flags: <defaults>
</compile_context>

<pallas_src>
import functools

import jax
import jax.numpy as jnp
from jax import lax
from jax.experimental import pallas as pl
from jax.experimental.pallas import tpu as pltpu


def _round_up(x, m):
    return ((x + m - 1) // m) * m


def _ge2e_tile_kernel(m_utts, n_rows, w_ref, b_ref, cent_ref, cn2_ref, icn_ref,
                      xt_ref, out_ref):
    """Partial GE2E loss for one row tile, lane-dense (N speakers, B rows)."""
    w = w_ref[0]
    b = b_ref[0]
    cent = cent_ref[...]                                   # (N, D) f32, resident
    cent_norm2 = cn2_ref[...]                              # (N, 1) f32, resident
    inv_cent_norm = icn_ref[...]                           # (N, 1) f32, resident
    xt = xt_ref[...].astype(jnp.float32)                   # (D, B) tile (transposed rows)
    n_spk = cent.shape[0]
    bsz = xt.shape[1]
    mf = jnp.float32(m_utts)
    eps = jnp.float32(1e-30)

    # Cross similarities: natural (N,D)x(D,B) MXU contraction -> lane-dense (N,B).
    cross = lax.dot_general(
        cent, xt, (((1,), (0,)), ((), ())),
        precision=lax.Precision.HIGHEST,
        preferred_element_type=jnp.float32)                # (N, B)

    # Squared utterance norms: sublane reduce of (D,B), already lane-dense (1,B).
    x_norm2 = jnp.sum(xt * xt, axis=0, keepdims=True)      # (1, B)
    inv_x_norm = lax.rsqrt(jnp.maximum(x_norm2, eps))      # (1, B)

    # Row index / validity / own-speaker mask, derived from the grid position.
    # No integer division: speaker k owns rows [k*M, (k+1)*M).  Padded rows
    # (row_id >= n_rows) match no speaker, so is_self is all-false there.
    col = lax.broadcasted_iota(jnp.int32, (1, bsz), 1)
    row_id = pl.program_id(0) * bsz + col                  # (1, B) global row index
    valid = row_id < n_rows                                # (1, B)
    spk_lo = lax.broadcasted_iota(jnp.int32, (n_spk, bsz), 0) * m_utts  # (N, B)
    is_self = (row_id >= spk_lo) & (row_id < spk_lo + m_utts)           # (N, B)

    # Diagonal pieces via small masked sublane reductions.
    cross_diag = jnp.sum(jnp.where(is_self, cross, 0.0),
                         axis=0, keepdims=True)            # (1, B)
    cn2_self = jnp.sum(jnp.where(is_self, cent_norm2, 0.0),
                       axis=0, keepdims=True)              # (1, B)

    # Leave-one-out centroid cosine without materializing excl:
    #   excl = (M*c_j - x)/(M-1);  cos_self = (M*(x.c_j) - |x|^2)/(|x| |M*c_j - x|)
    u = mf * mf * cn2_self - 2.0 * mf * cross_diag + x_norm2   # ||M*c_j - x||^2
    cos_self = (mf * cross_diag - x_norm2) * inv_x_norm * lax.rsqrt(
        jnp.maximum(u, eps))                               # (1, B)

    cos_other = cross * inv_cent_norm * inv_x_norm         # (N, B)
    cos = jnp.where(is_self, cos_self, cos_other)
    cos = jnp.maximum(cos, jnp.float32(1e-6))              # torch.clamp(., 1e-6)
    sim = cos * w + b                                      # (N, B)

    # L[row] = logsumexp_k sim[k,row] - sim[spk(row),row]; padded rows masked out.
    m = jnp.max(sim, axis=0, keepdims=True)
    lse = jnp.log(jnp.sum(jnp.exp(sim - m), axis=0, keepdims=True)) + m
    sim_self = jnp.maximum(cos_self, jnp.float32(1e-6)) * w + b
    out_ref[0, 0] = jnp.sum(jnp.where(valid, lse - sim_self, 0.0))


def ge2e_loss(dvecs, init_w=10.0, init_b=-5.0, block_rows=512):
    """dvecs: (N, M, D) float -> scalar GE2E softmax loss."""
    N, M, D = dvecs.shape
    assert M >= 2, "GE2E leave-one-out centroid needs M >= 2"
    R = N * M

    # Centroids + norms: tiny (N,D)/(N,1) reductions computed once and passed
    # as resident kernel inputs (hoisted out of the grid loop).
    centroids = jnp.mean(dvecs.astype(jnp.float32), axis=1)               # (N, D)
    cent_norm2 = jnp.sum(centroids * centroids, axis=-1, keepdims=True)   # (N, 1)
    inv_cent_norm = lax.rsqrt(jnp.maximum(cent_norm2, 1e-30))             # (N, 1)

    # Row tiling: B multiple of 128 (default 512, sweep 256-1024); rows padded
    # up to a multiple of B and masked in-kernel (no single-block fallback).
    B = min(_round_up(block_rows, 128), _round_up(R, 128))
    Rp = _round_up(R, B)
    G = Rp // B

    # One-time transpose so the MXU gets a natural (N,D)x(D,B) contraction and
    # x_norm2 stays lane-dense inside the kernel.  dvecs dtype is preserved
    # (bf16 inputs halve the streamed bytes; kernel casts to f32).
    xt = jnp.transpose(dvecs.reshape(R, D), (1, 0))                       # (D, R)
    if Rp != R:
        xt = jnp.pad(xt, ((0, 0), (0, Rp - R)))

    w_arr = jnp.asarray([init_w], jnp.float32)
    b_arr = jnp.asarray([init_b], jnp.float32)

    # Generous scoped-VMEM limit: double-buffered (D,B) tile + resident inputs.
    itemsize = jnp.dtype(dvecs.dtype).itemsize
    est = 2 * D * B * itemsize + N * D * 4 + 2 * N * 4 + (1 << 20)
    vmem_limit = int(min(64 << 20, max(32 << 20, 2 * est)))

    partials = pl.pallas_call(
        functools.partial(_ge2e_tile_kernel, M, R),
        out_shape=jax.ShapeDtypeStruct((G, 1), jnp.float32),
        grid=(G,),
        in_specs=[
            pl.BlockSpec(memory_space=pltpu.MemorySpace.SMEM),    # w
            pl.BlockSpec(memory_space=pltpu.MemorySpace.SMEM),    # b
            pl.BlockSpec((N, D), lambda i: (0, 0)),               # centroids (resident)
            pl.BlockSpec((N, 1), lambda i: (0, 0)),               # |c|^2      (resident)
            pl.BlockSpec((N, 1), lambda i: (0, 0)),               # 1/|c|      (resident)
            pl.BlockSpec((D, B), lambda i: (0, i)),               # transposed row tile
        ],
        out_specs=pl.BlockSpec((1, 1), lambda i: (i, 0),
                               memory_space=pltpu.MemorySpace.SMEM),
        compiler_params=pltpu.CompilerParams(
            dimension_semantics=("parallel",),
            vmem_limit_bytes=vmem_limit),
    )(w_arr, b_arr, centroids, cent_norm2, inv_cent_norm, xt)

    return jnp.sum(partials)


def ge2e_loss_ref(dvecs, init_w=10.0, init_b=-5.0):
    """Plain-JAX reference (direct transcription of the torch semantics)."""
    N, M, D = dvecs.shape
    x = dvecs.astype(jnp.float32)
    sums = jnp.sum(x, axis=1)
    centroids = sums / M
    excl = (sums[:, None, :] - x) / (M - 1)
    cross = jnp.einsum("jmd,kd->jmk", x, centroids, precision="highest")
    x_norm = jnp.linalg.norm(x, axis=-1)
    cent_norm = jnp.linalg.norm(centroids, axis=-1)
    excl_norm = jnp.linalg.norm(excl, axis=-1)
    excl_dot = jnp.sum(x * excl, axis=-1)
    cos_other = cross / (x_norm[:, :, None] * cent_norm[None, None, :])
    cos_self = excl_dot / (x_norm * excl_norm)
    eye = jnp.eye(N, dtype=bool)[:, None, :]
    cos = jnp.where(eye, cos_self[:, :, None], cos_other)
    cos = jnp.maximum(cos, 1e-6)
    sim = cos * init_w + init_b
    logp = jax.nn.log_softmax(sim, axis=-1)
    L = -jnp.sum(jnp.where(eye, logp, 0.0), axis=-1)
    return jnp.sum(L)


if __name__ == "__main__":
    # Small shapes consistent with (N speakers, M utterances, D embedding dim).
    # R = N*M = 400 is not a multiple of 128, exercising the pad-and-mask path.
    # The second call forces 128-row tiles so a multi-step grid (G=4) and the
    # parallel row-tile axis are exercised as well.
    N, M, D = 10, 40, 128
    key = jax.random.PRNGKey(0)
    dvecs = jax.random.normal(key, (N, M, D), dtype=jnp.float32)

    ref = jax.block_until_ready(ge2e_loss_ref(dvecs))
    loss = jax.block_until_ready(jax.jit(ge2e_loss)(dvecs))                    # B=512, G=1
    loss_tiled = jax.block_until_ready(
        jax.jit(functools.partial(ge2e_loss, block_rows=128))(dvecs))          # B=128, G=4

    assert jnp.isfinite(loss) and jnp.isfinite(loss_tiled), (loss, loss_tiled)
    assert jnp.allclose(loss, ref, rtol=2e-3, atol=1e-3), (loss, ref)
    assert jnp.allclose(loss_tiled, ref, rtol=2e-3, atol=1e-3), (loss_tiled, ref)
    print("KERNEL_OK")
</pallas_src>

<mosaic_0001>
module attributes {stable_mosaic.version = 11 : i64} {
  func.func @_ge2e_tile_kernel(%arg0: i32, %arg1: memref<1xf32, #tpu.memory_space<smem>>, %arg2: memref<1xf32, #tpu.memory_space<smem>>, %arg3: memref<10x128xf32, #tpu.memory_space<vmem>>, %arg4: memref<10x1xf32, #tpu.memory_space<vmem>>, %arg5: memref<10x1xf32, #tpu.memory_space<vmem>>, %arg6: memref<128x512xf32, #tpu.memory_space<vmem>>, %arg7: memref<1x1xf32, #tpu.memory_space<smem>>) attributes {dimension_semantics = [#tpu.dimension_semantics<parallel>], iteration_bounds = array<i64: 1>, scalar_prefetch = 0 : i64, scratch_operands = 0 : i64, tpu.core_type = #tpu.core_type<tc>, window_params = [{transform_indices = @transform_0, window_bounds = array<i64: 1>}, {transform_indices = @transform_1, window_bounds = array<i64: 1>}, {pipeline_mode = #tpu.pipeline_mode<synchronous>, transform_indices = @transform_2, window_bounds = array<i64: 10, 128>}, {pipeline_mode = #tpu.pipeline_mode<synchronous>, transform_indices = @transform_3, window_bounds = array<i64: 10, 1>}, {pipeline_mode = #tpu.pipeline_mode<synchronous>, transform_indices = @transform_4, window_bounds = array<i64: 10, 1>}, {transform_indices = @transform_5, window_bounds = array<i64: 128, 512>}, {transform_indices = @transform_6, window_bounds = array<i64: 1, 1>}]} {
    %c0 = arith.constant 0 : index
    %0 = memref.load %arg1[%c0] : memref<1xf32, #tpu.memory_space<smem>>
    %c0_0 = arith.constant 0 : index
    %1 = memref.load %arg2[%c0_0] : memref<1xf32, #tpu.memory_space<smem>>
    %c0_1 = arith.constant 0 : index
    %c0_2 = arith.constant 0 : index
    %2 = vector.load %arg3[%c0_1, %c0_2] : memref<10x128xf32, #tpu.memory_space<vmem>>, vector<10x128xf32>
    %c0_3 = arith.constant 0 : index
    %c0_4 = arith.constant 0 : index
    %3 = vector.load %arg4[%c0_3, %c0_4] : memref<10x1xf32, #tpu.memory_space<vmem>>, vector<10x1xf32>
    %c0_5 = arith.constant 0 : index
    %c0_6 = arith.constant 0 : index
    %4 = vector.load %arg5[%c0_5, %c0_6] : memref<10x1xf32, #tpu.memory_space<vmem>>, vector<10x1xf32>
    %c0_7 = arith.constant 0 : index
    %c0_8 = arith.constant 0 : index
    %5 = vector.load %arg6[%c0_7, %c0_8] : memref<128x512xf32, #tpu.memory_space<vmem>>, vector<128x512xf32>
    %cst = arith.constant dense<0.000000e+00> : vector<10x512xf32>
    %6 = tpu.matmul %2, %5, %cst {dimension_numbers = #tpu.dot_dimension_numbers<[1], [0], [0], [1], [0, 0, 1, 1], [], []>, precision = #tpu.contract_precision<fp32>} : vector<10x128xf32>, vector<128x512xf32>, vector<10x512xf32> -> vector<10x512xf32>
    %7 = arith.mulf %5, %5 : vector<128x512xf32>
    %cst_9 = arith.constant dense<0.000000e+00> : vector<512xf32>
    %8 = vector.multi_reduction <add>, %7, %cst_9 [0] : vector<128x512xf32> to vector<512xf32>
    %9 = vector.shape_cast %8 : vector<512xf32> to vector<1x512xf32>
    %cst_10 = arith.constant 1.000000e-30 : f32
    %10 = vector.broadcast %cst_10 : f32 to vector<1x512xf32>
    %11 = arith.maximumf %9, %10 : vector<1x512xf32>
    %12 = math.rsqrt %11 : vector<1x512xf32>
    %13 = tpu.iota {dimensions = array<i32: 1>} : vector<1x512xi32>
    %c512_i32 = arith.constant 512 : i32
    %14 = arith.muli %arg0, %c512_i32 : i32
    %15 = vector.broadcast %14 : i32 to vector<1x512xi32>
    %16 = arith.addi %15, %13 : vector<1x512xi32>
    %c400_i32 = arith.constant 400 : i32
    %17 = vector.broadcast %c400_i32 : i32 to vector<1x512xi32>
    %18 = arith.cmpi slt, %16, %17 : vector<1x512xi32>
    %19 = tpu.iota {dimensions = array<i32: 0>} : vector<10x512xi32>
    %c40_i32 = arith.constant 40 : i32
    %20 = vector.broadcast %c40_i32 : i32 to vector<10x512xi32>
    %21 = arith.muli %19, %20 : vector<10x512xi32>
    %22 = vector.broadcast %16 : vector<1x512xi32> to vector<10x512xi32>
    %23 = arith.cmpi sge, %22, %21 : vector<10x512xi32>
    %c40_i32_11 = arith.constant 40 : i32
    %24 = vector.broadcast %c40_i32_11 : i32 to vector<10x512xi32>
    %25 = arith.addi %21, %24 : vector<10x512xi32>
    %26 = vector.broadcast %16 : vector<1x512xi32> to vector<10x512xi32>
    %27 = arith.cmpi slt, %26, %25 : vector<10x512xi32>
    %28 = arith.andi %23, %27 : vector<10x512xi1>
    %cst_12 = arith.constant 0.000000e+00 : f32
    %29 = vector.broadcast %cst_12 : f32 to vector<10x512xf32>
    %30 = arith.select %28, %6, %29 : vector<10x512xi1>, vector<10x512xf32>
    %cst_13 = arith.constant dense<0.000000e+00> : vector<512xf32>
    %31 = vector.multi_reduction <add>, %30, %cst_13 [0] : vector<10x512xf32> to vector<512xf32>
    %32 = vector.shape_cast %31 : vector<512xf32> to vector<1x512xf32>
    %cst_14 = arith.constant 0.000000e+00 : f32
    %33 = vector.shape_cast %3 : vector<10x1xf32> to vector<10x1xf32>
    %34 = vector.broadcast %33 : vector<10x1xf32> to vector<10x512xf32>
    %35 = vector.broadcast %cst_14 : f32 to vector<10x512xf32>
    %36 = arith.select %28, %34, %35 : vector<10x512xi1>, vector<10x512xf32>
    %cst_15 = arith.constant dense<0.000000e+00> : vector<512xf32>
    %37 = vector.multi_reduction <add>, %36, %cst_15 [0] : vector<10x512xf32> to vector<512xf32>
    %38 = vector.shape_cast %37 : vector<512xf32> to vector<1x512xf32>
    %cst_16 = arith.constant 4.000000e+01 : f32
    %cst_17 = arith.constant 4.000000e+01 : f32
    %39 = arith.mulf %cst_16, %cst_17 : f32
    %40 = vector.broadcast %39 : f32 to vector<1x512xf32>
    %41 = arith.mulf %40, %38 : vector<1x512xf32>
    %cst_18 = arith.constant 2.000000e+00 : f32
    %cst_19 = arith.constant 4.000000e+01 : f32
    %42 = arith.mulf %cst_18, %cst_19 : f32
    %43 = vector.broadcast %42 : f32 to vector<1x512xf32>
    %44 = arith.mulf %43, %32 : vector<1x512xf32>
    %45 = arith.subf %41, %44 : vector<1x512xf32>
    %46 = arith.addf %45, %9 : vector<1x512xf32>
    %cst_20 = arith.constant 4.000000e+01 : f32
    %47 = vector.broadcast %cst_20 : f32 to vector<1x512xf32>
    %48 = arith.mulf %47, %32 : vector<1x512xf32>
    %49 = arith.subf %48, %9 : vector<1x512xf32>
    %50 = arith.mulf %49, %12 : vector<1x512xf32>
    %cst_21 = arith.constant 1.000000e-30 : f32
    %51 = vector.broadcast %cst_21 : f32 to vector<1x512xf32>
    %52 = arith.maximumf %46, %51 : vector<1x512xf32>
    %53 = math.rsqrt %52 : vector<1x512xf32>
    %54 = arith.mulf %50, %53 : vector<1x512xf32>
    %55 = vector.broadcast %4 : vector<10x1xf32> to vector<10x512xf32>
    %56 = arith.mulf %6, %55 : vector<10x512xf32>
    %57 = vector.broadcast %12 : vector<1x512xf32> to vector<10x512xf32>
    %58 = arith.mulf %56, %57 : vector<10x512xf32>
    %59 = vector.shape_cast %54 : vector<1x512xf32> to vector<1x512xf32>
    %60 = vector.broadcast %59 : vector<1x512xf32> to vector<10x512xf32>
    %61 = arith.select %28, %60, %58 : vector<10x512xi1>, vector<10x512xf32>
    %cst_22 = arith.constant 9.99999997E-7 : f32
    %62 = vector.broadcast %cst_22 : f32 to vector<10x512xf32>
    %63 = arith.maximumf %61, %62 : vector<10x512xf32>
    %64 = vector.broadcast %0 : f32 to vector<10x512xf32>
    %65 = arith.mulf %63, %64 : vector<10x512xf32>
    %66 = vector.broadcast %1 : f32 to vector<10x512xf32>
    %67 = arith.addf %65, %66 : vector<10x512xf32>
    %cst_23 = arith.constant dense<0xFF800000> : vector<512xf32>
    %68 = vector.multi_reduction <maximumf>, %67, %cst_23 [0] : vector<10x512xf32> to vector<512xf32>
    %69 = vector.shape_cast %68 : vector<512xf32> to vector<1x512xf32>
    %70 = vector.broadcast %69 : vector<1x512xf32> to vector<10x512xf32>
    %71 = arith.subf %67, %70 : vector<10x512xf32>
    %72 = math.exp %71 : vector<10x512xf32>
    %cst_24 = arith.constant dense<0.000000e+00> : vector<512xf32>
    %73 = vector.multi_reduction <add>, %72, %cst_24 [0] : vector<10x512xf32> to vector<512xf32>
    %74 = vector.shape_cast %73 : vector<512xf32> to vector<1x512xf32>
    %75 = math.log %74 : vector<1x512xf32>
    %76 = arith.addf %75, %69 : vector<1x512xf32>
    %cst_25 = arith.constant 9.99999997E-7 : f32
    %77 = vector.broadcast %cst_25 : f32 to vector<1x512xf32>
    %78 = arith.maximumf %54, %77 : vector<1x512xf32>
    %79 = vector.broadcast %0 : f32 to vector<1x512xf32>
    %80 = arith.mulf %78, %79 : vector<1x512xf32>
    %81 = vector.broadcast %1 : f32 to vector<1x512xf32>
    %82 = arith.addf %80, %81 : vector<1x512xf32>
    %83 = arith.subf %76, %82 : vector<1x512xf32>
    %cst_26 = arith.constant 0.000000e+00 : f32
    %84 = vector.broadcast %cst_26 : f32 to vector<1x512xf32>
    %85 = arith.select %18, %83, %84 : vector<1x512xi1>, vector<1x512xf32>
    %86 = vector.shape_cast %85 : vector<1x512xf32> to vector<1x1x512xf32>
    %cst_27 = arith.constant dense<0.000000e+00> : vector<1xf32>
    %87 = vector.multi_reduction <add>, %86, %cst_27 [1, 2] : vector<1x1x512xf32> to vector<1xf32>
    %88 = vector.shape_cast %87 : vector<1xf32> to vector<1x1x1xf32>
    %89 = vector.extract %88[0, 0, 0] : f32 from vector<1x1x1xf32>
    %c0_28 = arith.constant 0 : index
    %c0_29 = arith.constant 0 : index
    %90 = memref.load %arg7[%c0_28, %c0_29] : memref<1x1xf32, #tpu.memory_space<smem>>
    memref.store %89, %arg7[%c0_28, %c0_29] : memref<1x1xf32, #tpu.memory_space<smem>>
    return
  }
  func.func @transform_0(%arg0: i32) -> i32 {
    %c0_i32 = arith.constant 0 : i32
    %c0_i32_0 = arith.constant 0 : i32
    return %c0_i32 : i32
  }
  func.func @transform_1(%arg0: i32) -> i32 {
    %c0_i32 = arith.constant 0 : i32
    %c0_i32_0 = arith.constant 0 : i32
    return %c0_i32 : i32
  }
  func.func @transform_2(%arg0: i32) -> (i32, i32) {
    %c0_i32 = arith.constant 0 : i32
    %c0_i32_0 = arith.constant 0 : i32
    %c0_i32_1 = arith.constant 0 : i32
    return %c0_i32, %c0_i32_0 : i32, i32
  }
  func.func @transform_3(%arg0: i32) -> (i32, i32) {
    %c0_i32 = arith.constant 0 : i32
    %c0_i32_0 = arith.constant 0 : i32
    %c0_i32_1 = arith.constant 0 : i32
    return %c0_i32, %c0_i32_0 : i32, i32
  }
  func.func @transform_4(%arg0: i32) -> (i32, i32) {
    %c0_i32 = arith.constant 0 : i32
    %c0_i32_0 = arith.constant 0 : i32
    %c0_i32_1 = arith.constant 0 : i32
    return %c0_i32, %c0_i32_0 : i32, i32
  }
  func.func @transform_5(%arg0: i32) -> (i32, i32) {
    %c0_i32 = arith.constant 0 : i32
    %c0_i32_0 = arith.constant 0 : i32
    return %c0_i32, %arg0 : i32, i32
  }
  func.func @transform_6(%arg0: i32) -> (i32, i32) {
    %c0_i32 = arith.constant 0 : i32
    %c0_i32_0 = arith.constant 0 : i32
    return %arg0, %c0_i32 : i32, i32
  }
}

</mosaic_0001>

<llo_original>
// kernel: ge2e_loss.1
$region0: #{ge2e_loss.1}
  #allocation0 [shape = 'u32[]', space=smem, size = 0x4, offset = 0x4, fixed_abs, tag = 'smem constant byte address 0x4 - core index']
  #allocation1 [shape = 'u32[144,128]{1,0:T(1,128)}', space=vmem, size = 0x12000, scoped, tag = 'internal scratch']
  #allocation2 [shape = 'f32[1]{0:T(128)S(6)}', space=smem, size = 0x200, scoped, tag = 'scoped memory for ge2e_loss.1']
  #allocation3 [shape = 'f32[1]{0:T(128)S(6)}', space=smem, size = 0x200, scoped, tag = 'scoped memory for ge2e_loss.1']
  %s0 = inlined_call_operand.<no memory space> [shape: f32[1], index: 0, kind: input, shape index: {}]
  %s1 = inlined_call_operand.<no memory space> [shape: f32[1], index: 1, kind: input, shape index: {}]
  %s2 = inlined_call_operand.vmem [shape: f32[10,128], index: 2, kind: input, shape index: {}]
  %s3 = inlined_call_operand.vmem [shape: f32[10,1], index: 3, kind: input, shape index: {}]
  %s4 = inlined_call_operand.vmem [shape: f32[10,1], index: 4, kind: input, shape index: {}]
  %s5 = inlined_call_operand.vmem [shape: f32[128,512], index: 5, kind: input, shape index: {}]
  %s6 = inlined_call_operand.hbm [shape: f32[1,1], index: 6, kind: output, shape index: {}]
  %s7 = sld [smem:[#allocation0]]
  $region34: #{ge2e_loss.1} parent=0
    _
  %s9 = ssub.s32 1, %s7
  %s10 = scalar_select 0, %s9, %s7
  %11 = sst [smem:[#allocation2]] %s0
  %12 = sst [smem:[#allocation3]] %s1
  $region1: #{ge2e_loss.1} parent=0
    #allocation4 [shape = 'u8[512]{0}', space=smem, size = 0x200, scoped, tag = 'output window, operand 0, single buffered']
    #allocation5 [shape = 's32[1]{0}', space=sflag, size = 0x4, scoped, tag = 'scoped memory for ge2e_loss.1']
    %13 = vsyncpa [#allocation5], 0
    // Predicated region
    $region2: #{ge2e_loss.1} parent=1 // pred_check
      _
    $region3: #{ge2e_loss.1} parent=1 // pred_check_branch
      %15 = sbr.rel (0) target = $region5
    $region4: #{ge2e_loss.1} parent=1 // pred_region
      _
    $region5: #{ge2e_loss.1} parent=1 // pred_fallthru
      _
    // Predicated region
    $region6: #{ge2e_loss.1} parent=1 // pred_check
      _
    $region7: #{ge2e_loss.1} parent=1 // pred_check_branch
      %17 = sbr.rel (0) target = $region9
    $region8: #{ge2e_loss.1} parent=1 // pred_region
      _
    $region9: #{ge2e_loss.1} parent=1 // pred_fallthru
      _
    // Predicated region
    $region10: #{ge2e_loss.1} parent=1 // pred_check
      _
    $region11: #{ge2e_loss.1} parent=1 // pred_check_branch
      %19 = sbr.rel (0) target = $region13
    $region12: #{ge2e_loss.1} parent=1 // pred_region
      _
    $region13: #{ge2e_loss.1} parent=1 // pred_fallthru
      _
    // Predicated region
    $region14: #{ge2e_loss.1} parent=1 // pred_check
      _
    $region15: #{ge2e_loss.1} parent=1 // pred_check_branch
      %21 = sbr.rel (0) target = $region17
    $region16: #{ge2e_loss.1} parent=1 // pred_region
      _
    $region17: #{ge2e_loss.1} parent=1 // pred_fallthru
      _
    // Predicated region
    $region18: #{ge2e_loss.1} parent=1 // pred_check
      _
    $region19: #{ge2e_loss.1} parent=1 // pred_check_branch
      %23 = sbr.rel (0) target = $region21
    $region20: #{ge2e_loss.1} parent=1 // pred_region
      _
    $region21: #{ge2e_loss.1} parent=1 // pred_fallthru
      _
    // Predicated region
    $region22: #{ge2e_loss.1} parent=1 // pred_check
      _
    $region23: #{ge2e_loss.1} parent=1 // pred_check_branch
      %25 = sbr.rel (0) target = $region25
    $region24: #{ge2e_loss.1} parent=1 // pred_region
      _
    $region25: #{ge2e_loss.1} parent=1 // pred_fallthru
      _
    %s26 = sld [smem:[#allocation2]]
    %s27 = sld [smem:[#allocation3]]
    %v28 = vld [vmem:[%s2] sm:$0xff]
    %v29 = vld [vmem:[%s2 + $0x8] sm:$0x3]
    %v30 = vld [vmem:[%s3] sm:$0xff]
    %v31 = vld [vmem:[%s3 + $0x8] sm:$0x3]
    %v32 = vld [vmem:[%s4] sm:$0xff]
    %v33 = vld [vmem:[%s4 + $0x8] sm:$0x3]
    %v34 = vld [vmem:[%s5] sm:$0xff]
    %v35 = vld [vmem:[%s5 + $0x8] sm:$0xff]
    %v36 = vld [vmem:[%s5 + $0x10] sm:$0xff]
    %v37 = vld [vmem:[%s5 + $0x18] sm:$0xff]
    %v38 = vld [vmem:[%s5 + $0x20] sm:$0xff]
    %v39 = vld [vmem:[%s5 + $0x28] sm:$0xff]
    %v40 = vld [vmem:[%s5 + $0x30] sm:$0xff]
    %v41 = vld [vmem:[%s5 + $0x38] sm:$0xff]
    %v42 = vld [vmem:[%s5 + $0x40] sm:$0xff]
    %v43 = vld [vmem:[%s5 + $0x48] sm:$0xff]
    %v44 = vld [vmem:[%s5 + $0x50] sm:$0xff]
    %v45 = vld [vmem:[%s5 + $0x58] sm:$0xff]
    %v46 = vld [vmem:[%s5 + $0x60] sm:$0xff]
    %v47 = vld [vmem:[%s5 + $0x68] sm:$0xff]
    %v48 = vld [vmem:[%s5 + $0x70] sm:$0xff]
    %v49 = vld [vmem:[%s5 + $0x78] sm:$0xff]
    %v50 = vld [vmem:[%s5 + $0x80] sm:$0xff]
    %v51 = vld [vmem:[%s5 + $0x88] sm:$0xff]
    %v52 = vld [vmem:[%s5 + $0x90] sm:$0xff]
    %v53 = vld [vmem:[%s5 + $0x98] sm:$0xff]
    %v54 = vld [vmem:[%s5 + $0xa0] sm:$0xff]
    %v55 = vld [vmem:[%s5 + $0xa8] sm:$0xff]
    %v56 = vld [vmem:[%s5 + $0xb0] sm:$0xff]
    %v57 = vld [vmem:[%s5 + $0xb8] sm:$0xff]
    %v58 = vld [vmem:[%s5 + $0xc0] sm:$0xff]
    %v59 = vld [vmem:[%s5 + $0xc8] sm:$0xff]
    %v60 = vld [vmem:[%s5 + $0xd0] sm:$0xff]
    %v61 = vld [vmem:[%s5 + $0xd8] sm:$0xff]
    %v62 = vld [vmem:[%s5 + $0xe0] sm:$0xff]
    %v63 = vld [vmem:[%s5 + $0xe8] sm:$0xff]
    %v64 = vld [vmem:[%s5 + $0xf0] sm:$0xff]
    %v65 = vld [vmem:[%s5 + $0xf8] sm:$0xff]
    %v66 = vld [vmem:[%s5 + $0x100] sm:$0xff]
    %v67 = vld [vmem:[%s5 + $0x108] sm:$0xff]
    %v68 = vld [vmem:[%s5 + $0x110] sm:$0xff]
    %v69 = vld [vmem:[%s5 + $0x118] sm:$0xff]
    %v70 = vld [vmem:[%s5 + $0x120] sm:$0xff]
    %v71 = vld [vmem:[%s5 + $0x128] sm:$0xff]
    %v72 = vld [vmem:[%s5 + $0x130] sm:$0xff]
    %v73 = vld [vmem:[%s5 + $0x138] sm:$0xff]
    %v74 = vld [vmem:[%s5 + $0x140] sm:$0xff]
    %v75 = vld [vmem:[%s5 + $0x148] sm:$0xff]
    %v76 = vld [vmem:[%s5 + $0x150] sm:$0xff]
    %v77 = vld [vmem:[%s5 + $0x158] sm:$0xff]
    %v78 = vld [vmem:[%s5 + $0x160] sm:$0xff]
    %v79 = vld [vmem:[%s5 + $0x168] sm:$0xff]
    %v80 = vld [vmem:[%s5 + $0x170] sm:$0xff]
    %v81 = vld [vmem:[%s5 + $0x178] sm:$0xff]
    %v82 = vld [vmem:[%s5 + $0x180] sm:$0xff]
    %v83 = vld [vmem:[%s5 + $0x188] sm:$0xff]
    %v84 = vld [vmem:[%s5 + $0x190] sm:$0xff]
    %v85 = vld [vmem:[%s5 + $0x198] sm:$0xff]
    %v86 = vld [vmem:[%s5 + $0x1a0] sm:$0xff]
    %v87 = vld [vmem:[%s5 + $0x1a8] sm:$0xff]
    %v88 = vld [vmem:[%s5 + $0x1b0] sm:$0xff]
    %v89 = vld [vmem:[%s5 + $0x1b8] sm:$0xff]
    %v90 = vld [vmem:[%s5 + $0x1c0] sm:$0xff]
    %v91 = vld [vmem:[%s5 + $0x1c8] sm:$0xff]
    %v92 = vld [vmem:[%s5 + $0x1d0] sm:$0xff]
    %v93 = vld [vmem:[%s5 + $0x1d8] sm:$0xff]
    %v94 = vld [vmem:[%s5 + $0x1e0] sm:$0xff]
    %v95 = vld [vmem:[%s5 + $0x1e8] sm:$0xff]
    %v96 = vld [vmem:[%s5 + $0x1f0] sm:$0xff]
    %v97 = vld [vmem:[%s5 + $0x1f8] sm:$0xff]
    %v98 = vand.u32 %v95, 4294901760
    %99 = vmatprep.subr.mxu0 %v98
    %v100 = vand.u32 %v94, 4294901760
    %101 = vmatpush1.msra.mxu0 %v100
    %v102 = vand.u32 %v91, 4294901760
    %103 = vmatprep.subr.mxu0 %v102
    %v104 = vand.u32 %v90, 4294901760
    %105 = vmatpush1.msra.mxu0 %v104
    %v106 = vand.u32 %v87, 4294901760
    %107 = vmatprep.subr.mxu0 %v106
    %v108 = vand.u32 %v86, 4294901760
    %109 = vmatpush1.msra.mxu0 %v108
    %v110 = vand.u32 %v83, 4294901760
    %111 = vmatprep.subr.mxu0 %v110
    %v112 = vand.u32 %v82, 4294901760
    %113 = vmatpush1.msra.mxu0 %v112
    %v114 = vand.u32 %v79, 4294901760
    %115 = vmatprep.subr.mxu0 %v114
    %v116 = vand.u32 %v78, 4294901760
    %117 = vmatpush1.msra.mxu0 %v116
    %v118 = vand.u32 %v75, 4294901760
    %119 = vmatprep.subr.mxu0 %v118
    %v120 = vand.u32 %v74, 4294901760
    %121 = vmatpush1.msra.mxu0 %v120
    %v122 = vand.u32 %v71, 4294901760
    %123 = vmatprep.subr.mxu0 %v122
    %v124 = vand.u32 %v70, 4294901760
    %125 = vmatpush1.msra.mxu0 %v124
    %v126 = vand.u32 %v67, 4294901760
    %127 = vmatprep.subr.mxu0 %v126
    %v128 = vand.u32 %v66, 4294901760
    %129 = vmatpush1.msra.mxu0 %v128
    %v130 = vand.u32 %v63, 4294901760
    %131 = vmatprep.subr.mxu0 %v130
    %v132 = vand.u32 %v62, 4294901760
    %133 = vmatpush1.msra.mxu0 %v132
    %v134 = vand.u32 %v59, 4294901760
    %135 = vmatprep.subr.mxu0 %v134
    %v136 = vand.u32 %v58, 4294901760
    %137 = vmatpush1.msra.mxu0 %v136
    %v138 = vand.u32 %v55, 4294901760
    %139 = vmatprep.subr.mxu0 %v138
    %v140 = vand.u32 %v54, 4294901760
    %141 = vmatpush1.msra.mxu0 %v140
    %v142 = vand.u32 %v51, 4294901760
    %143 = vmatprep.subr.mxu0 %v142
    %v144 = vand.u32 %v50, 4294901760
    %145 = vmatpush1.msra.mxu0 %v144
    %v146 = vand.u32 %v47, 4294901760
    %147 = vmatprep.subr.mxu0 %v146
    %v148 = vand.u32 %v46, 4294901760
    %149 = vmatpush1.msra.mxu0 %v148
    %v150 = vand.u32 %v43, 4294901760
    %151 = vmatprep.subr.mxu0 %v150
    %v152 = vand.u32 %v42, 4294901760
    %153 = vmatpush1.msra.mxu0 %v152
    %v154 = vand.u32 %v39, 4294901760
    %155 = vmatprep.subr.mxu0 %v154
    %v156 = vand.u32 %v38, 4294901760
    %157 = vmatpush1.msra.mxu0 %v156
    %v158 = vand.u32 %v35, 4294901760
    %159 = vmatprep.subr.mxu0 %v158
    %v160 = vand.u32 %v34, 4294901760
    %161 = vmatpush1.msra.mxu0 %v160
    %162 = vmatprep.subr.mxu0 0.0
    %163 = vmatpush2.msra.mxu0 0.0
    %164 = vmatprep.subr.mxu0 0.0
    %165 = vmatpush2.msra.mxu0 0.0
    %166 = vmatprep.subr.mxu0 0.0
    %167 = vmatpush2.msra.mxu0 0.0
    %168 = vmatprep.subr.mxu0 0.0
    %169 = vmatpush2.msra.mxu0 0.0
    %170 = vmatprep.subr.mxu0 0.0
    %171 = vmatpush2.msra.mxu0 0.0
    %172 = vmatprep.subr.mxu0 0.0
    %173 = vmatpush2.msra.mxu0 0.0
    %174 = vmatprep.subr.mxu0 0.0
    %175 = vmatpush2.msra.mxu0 0.0
    %176 = vmatprep.subr.mxu0 0.0
    %177 = vmatpush2.msra.mxu0 0.0
    %178 = vmatprep.subr.mxu0 0.0
    %179 = vmatpush2.msra.mxu0 0.0
    %180 = vmatprep.subr.mxu0 0.0
    %181 = vmatpush2.msra.mxu0 0.0
    %182 = vmatprep.subr.mxu0 0.0
    %183 = vmatpush2.msra.mxu0 0.0
    %184 = vmatprep.subr.mxu0 0.0
    %185 = vmatpush2.msra.mxu0 0.0
    %186 = vmatprep.subr.mxu0 0.0
    %187 = vmatpush2.msra.mxu0 0.0
    %188 = vmatprep.subr.mxu0 0.0
    %189 = vmatpush2.msra.mxu0 0.0
    %190 = vmatprep.subr.mxu0 0.0
    %191 = vmatpush2.msra.mxu0 0.0
    %192 = vmatprep.subr.mxu0 0.0
    %193 = vmatpush2.msra.mxu0 0.0
    %194 = vmatprep.mubr.f32.mxu0 0.0
    %v195 = vand.u32 %v28, 4294901760
    %v196 = vsub.f32 %v28, %v195
    %v197 = vand.u32 %v196, 4294901760
    %v198 = vsub.f32 %v196, %v197
    %v199 = vand.u32 %v198, 4294901760
    %200 = vmatmul.mubr.f32.gmra.mxu0 %v199
    %v201 = vpop.f32.mrf.mxu0
    %v202 = vadd.f32 0.0, %v201
    %v203 = vpop.f32.mrf.mxu0
    %v204 = vadd.f32 0.0, %v203
    %205 = vmatprep.mubr.f32.mxu0 0.0
    %v206 = vand.u32 %v29, 4294901760
    %v207 = vsub.f32 %v29, %v206
    %v208 = vand.u32 %v207, 4294901760
    %v209 = vsub.f32 %v207, %v208
    %v210 = vand.u32 %v209, 4294901760
    %211 = vmatmul.mubr.f32.gmra.mxu0 %v210
    %v212 = vpop.f32.mrf.mxu0
    %v213 = vadd.f32 0.0, %v212
    %v214 = vpop.f32.mrf.mxu0
    %v215 = vadd.f32 0.0, %v214
    %216 = vdwg.mxu0
    %v217 = vand.u32 %v95, 4294901760
    %v218 = vsub.f32 %v95, %v217
    %v219 = vand.u32 %v218, 4294901760
    %v220 = vsub.f32 %v218, %v219
    %v221 = vand.u32 %v220, 4294901760
    %222 = vmatprep.subr.mxu0 %v221
    %v223 = vand.u32 %v94, 4294901760
    %v224 = vsub.f32 %v94, %v223
    %v225 = vand.u32 %v224, 4294901760
    %v226 = vsub.f32 %v224, %v225
    %v227 = vand.u32 %v226, 4294901760
    %228 = vmatpush1.msra.mxu0 %v227
    %v229 = vand.u32 %v91, 4294901760
    %v230 = vsub.f32 %v91, %v229
    %v231 = vand.u32 %v230, 4294901760
    %v232 = vsub.f32 %v230, %v231
    %v233 = vand.u32 %v232, 4294901760
    %234 = vmatprep.subr.mxu0 %v233
    %v235 = vand.u32 %v90, 4294901760
    %v236 = vsub.f32 %v90, %v235
    %v237 = vand.u32 %v236, 4294901760
    %v238 = vsub.f32 %v236, %v237
    %v239 = vand.u32 %v238, 4294901760
    %240 = vmatpush1.msra.mxu0 %v239
    %v241 = vand.u32 %v87, 4294901760
    %v242 = vsub.f32 %v87, %v241
    %v243 = vand.u32 %v242, 4294901760
    %v244 = vsub.f32 %v242, %v243
    %v245 = vand.u32 %v244, 4294901760
    %246 = vmatprep.subr.mxu0 %v245
    %v247 = vand.u32 %v86, 4294901760
    %v248 = vsub.f32 %v86, %v247
    %v249 = vand.u32 %v248, 4294901760
    %v250 = vsub.f32 %v248, %v249
    %v251 = vand.u32 %v250, 4294901760
    %252 = vmatpush1.msra.mxu0 %v251
    %v253 = vand.u32 %v83, 4294901760
    %v254 = vsub.f32 %v83, %v253
    %v255 = vand.u32 %v254, 4294901760
    %v256 = vsub.f32 %v254, %v255
    %v257 = vand.u32 %v256, 4294901760
    %258 = vmatprep.subr.mxu0 %v257
    %v259 = vand.u32 %v82, 4294901760
    %v260 = vsub.f32 %v82, %v259
    %v261 = vand.u32 %v260, 4294901760
    %v262 = vsub.f32 %v260, %v261
    %v263 = vand.u32 %v262, 4294901760
    %264 = vmatpush1.msra.mxu0 %v263
    %v265 = vand.u32 %v79, 4294901760
    %v266 = vsub.f32 %v79, %v265
    %v267 = vand.u32 %v266, 4294901760
    %v268 = vsub.f32 %v266, %v267
    %v269 = vand.u32 %v268, 4294901760
    %270 = vmatprep.subr.mxu0 %v269
    %v271 = vand.u32 %v78, 4294901760
    %v272 = vsub.f32 %v78, %v271
    %v273 = vand.u32 %v272, 4294901760
    %v274 = vsub.f32 %v272, %v273
    %v275 = vand.u32 %v274, 4294901760
    %276 = vmatpush1.msra.mxu0 %v275
    %v277 = vand.u32 %v75, 4294901760
    %v278 = vsub.f32 %v75, %v277
    %v279 = vand.u32 %v278, 4294901760
    %v280 = vsub.f32 %v278, %v279
    %v281 = vand.u32 %v280, 4294901760
    %282 = vmatprep.subr.mxu0 %v281
    %v283 = vand.u32 %v74, 4294901760
    %v284 = vsub.f32 %v74, %v283
    %v285 = vand.u32 %v284, 4294901760
    %v286 = vsub.f32 %v284, %v285
    %v287 = vand.u32 %v286, 4294901760
    %288 = vmatpush1.msra.mxu0 %v287
    %v289 = vand.u32 %v71, 4294901760
    %v290 = vsub.f32 %v71, %v289
    %v291 = vand.u32 %v290, 4294901760
    %v292 = vsub.f32 %v290, %v291
    %v293 = vand.u32 %v292, 4294901760
    %294 = vmatprep.subr.mxu0 %v293
    %v295 = vand.u32 %v70, 4294901760
    %v296 = vsub.f32 %v70, %v295
    %v297 = vand.u32 %v296, 4294901760
    %v298 = vsub.f32 %v296, %v297
    %v299 = vand.u32 %v298, 4294901760
    %300 = vmatpush1.msra.mxu0 %v299
    %v301 = vand.u32 %v67, 4294901760
    %v302 = vsub.f32 %v67, %v301
    %v303 = vand.u32 %v302, 4294901760
    %v304 = vsub.f32 %v302, %v303
    %v305 = vand.u32 %v304, 4294901760
    %306 = vmatprep.subr.mxu0 %v305
    %v307 = vand.u32 %v66, 4294901760
    %v308 = vsub.f32 %v66, %v307
    %v309 = vand.u32 %v308, 4294901760
    %v310 = vsub.f32 %v308, %v309
    %v311 = vand.u32 %v310, 4294901760
    %312 = vmatpush1.msra.mxu0 %v311
    %v313 = vand.u32 %v63, 4294901760
    %v314 = vsub.f32 %v63, %v313
    %v315 = vand.u32 %v314, 4294901760
    %v316 = vsub.f32 %v314, %v315
    %v317 = vand.u32 %v316, 4294901760
    %318 = vmatprep.subr.mxu0 %v317
    %v319 = vand.u32 %v62, 4294901760
    %v320 = vsub.f32 %v62, %v319
    %v321 = vand.u32 %v320, 4294901760
    %v322 = vsub.f32 %v320, %v321
    %v323 = vand.u32 %v322, 4294901760
    %324 = vmatpush1.msra.mxu0 %v323
    %v325 = vand.u32 %v59, 4294901760
    %v326 = vsub.f32 %v59, %v325
    %v327 = vand.u32 %v326, 4294901760
    %v328 = vsub.f32 %v326, %v327
    %v329 = vand.u32 %v328, 4294901760
    %330 = vmatprep.subr.mxu0 %v329
    %v331 = vand.u32 %v58, 4294901760
    %v332 = vsub.f32 %v58, %v331
    %v333 = vand.u32 %v332, 4294901760
    %v334 = vsub.f32 %v332, %v333
    %v335 = vand.u32 %v334, 4294901760
    %336 = vmatpush1.msra.mxu0 %v335
    %v337 = vand.u32 %v55, 4294901760
    %v338 = vsub.f32 %v55, %v337
    %v339 = vand.u32 %v338, 4294901760
    %v340 = vsub.f32 %v338, %v339
    %v341 = vand.u32 %v340, 4294901760
    %342 = vmatprep.subr.mxu0 %v341
    %v343 = vand.u32 %v54, 4294901760
    %v344 = vsub.f32 %v54, %v343
    %v345 = vand.u32 %v344, 4294901760
    %v346 = vsub.f32 %v344, %v345
    %v347 = vand.u32 %v346, 4294901760
    %348 = vmatpush1.msra.mxu0 %v347
    %v349 = vand.u32 %v51, 4294901760
    %v350 = vsub.f32 %v51, %v349
    %v351 = vand.u32 %v350, 4294901760
    %v352 = vsub.f32 %v350, %v351
    %v353 = vand.u32 %v352, 4294901760
    %354 = vmatprep.subr.mxu0 %v353
    %v355 = vand.u32 %v50, 4294901760
    %v356 = vsub.f32 %v50, %v355
    %v357 = vand.u32 %v356, 4294901760
    %v358 = vsub.f32 %v356, %v357
    %v359 = vand.u32 %v358, 4294901760
    %360 = vmatpush1.msra.mxu0 %v359
    %v361 = vand.u32 %v47, 4294901760
    %v362 = vsub.f32 %v47, %v361
    %v363 = vand.u32 %v362, 4294901760
    %v364 = vsub.f32 %v362, %v363
    %v365 = vand.u32 %v364, 4294901760
    %366 = vmatprep.subr.mxu0 %v365
    %v367 = vand.u32 %v46, 4294901760
    %v368 = vsub.f32 %v46, %v367
    %v369 = vand.u32 %v368, 4294901760
    %v370 = vsub.f32 %v368, %v369
    %v371 = vand.u32 %v370, 4294901760
    %372 = vmatpush1.msra.mxu0 %v371
    %v373 = vand.u32 %v43, 4294901760
    %v374 = vsub.f32 %v43, %v373
    %v375 = vand.u32 %v374, 4294901760
    %v376 = vsub.f32 %v374, %v375
    %v377 = vand.u32 %v376, 4294901760
    %378 = vmatprep.subr.mxu0 %v377
    %v379 = vand.u32 %v42, 4294901760
    %v380 = vsub.f32 %v42, %v379
    %v381 = vand.u32 %v380, 4294901760
    %v382 = vsub.f32 %v380, %v381
    %v383 = vand.u32 %v382, 4294901760
    %384 = vmatpush1.msra.mxu0 %v383
    %v385 = vand.u32 %v39, 4294901760
    %v386 = vsub.f32 %v39, %v385
    %v387 = vand.u32 %v386, 4294901760
    %v388 = vsub.f32 %v386, %v387
    %v389 = vand.u32 %v388, 4294901760
    %390 = vmatprep.subr.mxu0 %v389
    %v391 = vand.u32 %v38, 4294901760
    %v392 = vsub.f32 %v38, %v391
    %v393 = vand.u32 %v392, 4294901760
    %v394 = vsub.f32 %v392, %v393
    %v395 = vand.u32 %v394, 4294901760
    %396 = vmatpush1.msra.mxu0 %v395
    %v397 = vand.u32 %v35, 4294901760
    %v398 = vsub.f32 %v35, %v397
    %v399 = vand.u32 %v398, 4294901760
    %v400 = vsub.f32 %v398, %v399
    %v401 = vand.u32 %v400, 4294901760
    %402 = vmatprep.subr.mxu0 %v401
    %v403 = vand.u32 %v34, 4294901760
    %v404 = vsub.f32 %v34, %v403
    %v405 = vand.u32 %v404, 4294901760
    %v406 = vsub.f32 %v404, %v405
    %v407 = vand.u32 %v406, 4294901760
    %408 = vmatpush1.msra.mxu0 %v407
    %409 = vmatprep.subr.mxu0 0.0
    %410 = vmatpush2.msra.mxu0 0.0
    %411 = vmatprep.subr.mxu0 0.0
    %412 = vmatpush2.msra.mxu0 0.0
    %413 = vmatprep.subr.mxu0 0.0
    %414 = vmatpush2.msra.mxu0 0.0
    %415 = vmatprep.subr.mxu0 0.0
    %416 = vmatpush2.msra.mxu0 0.0
    %417 = vmatprep.subr.mxu0 0.0
    %418 = vmatpush2.msra.mxu0 0.0
    %419 = vmatprep.subr.mxu0 0.0
    %420 = vmatpush2.msra.mxu0 0.0
    %421 = vmatprep.subr.mxu0 0.0
    %422 = vmatpush2.msra.mxu0 0.0
    %423 = vmatprep.subr.mxu0 0.0
    %424 = vmatpush2.msra.mxu0 0.0
    %425 = vmatprep.subr.mxu0 0.0
    %426 = vmatpush2.msra.mxu0 0.0
    %427 = vmatprep.subr.mxu0 0.0
    %428 = vmatpush2.msra.mxu0 0.0
    %429 = vmatprep.subr.mxu0 0.0
    %430 = vmatpush2.msra.mxu0 0.0
    %431 = vmatprep.subr.mxu0 0.0
    %432 = vmatpush2.msra.mxu0 0.0
    %433 = vmatprep.subr.mxu0 0.0
    %434 = vmatpush2.msra.mxu0 0.0
    %435 = vmatprep.subr.mxu0 0.0
    %436 = vmatpush2.msra.mxu0 0.0
    %437 = vmatprep.subr.mxu0 0.0
    %438 = vmatpush2.msra.mxu0 0.0
    %439 = vmatprep.subr.mxu0 0.0
    %440 = vmatpush2.msra.mxu0 0.0
    %441 = vmatprep.mubr.f32.mxu0 0.0
    %v442 = vand.u32 %v28, 4294901760
    %443 = vmatmul.mubr.f32.gmra.mxu0 %v442
    %v444 = vpop.f32.mrf.mxu0
    %v445 = vadd.f32 %v202, %v444
    %v446 = vpop.f32.mrf.mxu0
    %v447 = vadd.f32 %v204, %v446
    %448 = vmatprep.mubr.f32.mxu0 0.0
    %v449 = vand.u32 %v29, 4294901760
    %450 = vmatmul.mubr.f32.gmra.mxu0 %v449
    %v451 = vpop.f32.mrf.mxu0
    %v452 = vadd.f32 %v213, %v451
    %v453 = vpop.f32.mrf.mxu0
    %v454 = vadd.f32 %v215, %v453
    %455 = vdwg.mxu0
    %v456 = vand.u32 %v95, 4294901760
    %v457 = vsub.f32 %v95, %v456
    %458 = vmatprep.subr.mxu0 %v457
    %v459 = vand.u32 %v94, 4294901760
    %v460 = vsub.f32 %v94, %v459
    %461 = vmatpush1.msra.mxu0 %v460
    %v462 = vand.u32 %v91, 4294901760
    %v463 = vsub.f32 %v91, %v462
    %464 = vmatprep.subr.mxu0 %v463
    %v465 = vand.u32 %v90, 4294901760
    %v466 = vsub.f32 %v90, %v465
    %467 = vmatpush1.msra.mxu0 %v466
    %v468 = vand.u32 %v87, 4294901760
    %v469 = vsub.f32 %v87, %v468
    %470 = vmatprep.subr.mxu0 %v469
    %v471 = vand.u32 %v86, 4294901760
    %v472 = vsub.f32 %v86, %v471
    %473 = vmatpush1.msra.mxu0 %v472
    %v474 = vand.u32 %v83, 4294901760
    %v475 = vsub.f32 %v83, %v474
    %476 = vmatprep.subr.mxu0 %v475
    %v477 = vand.u32 %v82, 4294901760
    %v478 = vsub.f32 %v82, %v477
    %479 = vmatpush1.msra.mxu0 %v478
    %v480 = vand.u32 %v79, 4294901760
    %v481 = vsub.f32 %v79, %v480
    %482 = vmatprep.subr.mxu0 %v481
    %v483 = vand.u32 %v78, 4294901760
    %v484 = vsub.f32 %v78, %v483
    %485 = vmatpush1.msra.mxu0 %v484
    %v486 = vand.u32 %v75, 4294901760
    %v487 = vsub.f32 %v75, %v486
    %488 = vmatprep.subr.mxu0 %v487
    %v489 = vand.u32 %v74, 4294901760
    %v490 = vsub.f32 %v74, %v489
    %491 = vmatpush1.msra.mxu0 %v490
    %v492 = vand.u32 %v71, 4294901760
    %v493 = vsub.f32 %v71, %v492
    %494 = vmatprep.subr.mxu0 %v493
    %v495 = vand.u32 %v70, 4294901760
    %v496 = vsub.f32 %v70, %v495
    %497 = vmatpush1.msra.mxu0 %v496
    %v498 = vand.u32 %v67, 4294901760
    %v499 = vsub.f32 %v67, %v498
    %500 = vmatprep.subr.mxu0 %v499
    %v501 = vand.u32 %v66, 4294901760
    %v502 = vsub.f32 %v66, %v501
    %503 = vmatpush1.msra.mxu0 %v502
    %v504 = vand.u32 %v63, 4294901760
    %v505 = vsub.f32 %v63, %v504
    %506 = vmatprep.subr.mxu0 %v505
    %v507 = vand.u32 %v62, 4294901760
    %v508 = vsub.f32 %v62, %v507
    %509 = vmatpush1.msra.mxu0 %v508
    %v510 = vand.u32 %v59, 4294901760
    %v511 = vsub.f32 %v59, %v510
    %512 = vmatprep.subr.mxu0 %v511
    %v513 = vand.u32 %v58, 4294901760
    %v514 = vsub.f32 %v58, %v513
    %515 = vmatpush1.msra.mxu0 %v514
    %v516 = vand.u32 %v55, 4294901760
    %v517 = vsub.f32 %v55, %v516
    %518 = vmatprep.subr.mxu0 %v517
    %v519 = vand.u32 %v54, 4294901760
    %v520 = vsub.f32 %v54, %v519
    %521 = vmatpush1.msra.mxu0 %v520
    %v522 = vand.u32 %v51, 4294901760
    %v523 = vsub.f32 %v51, %v522
    %524 = vmatprep.subr.mxu0 %v523
    %v525 = vand.u32 %v50, 4294901760
    %v526 = vsub.f32 %v50, %v525
    %527 = vmatpush1.msra.mxu0 %v526
    %v528 = vand.u32 %v47, 4294901760
    %v529 = vsub.f32 %v47, %v528
    %530 = vmatprep.subr.mxu0 %v529
    %v531 = vand.u32 %v46, 4294901760
    %v532 = vsub.f32 %v46, %v531
    %533 = vmatpush1.msra.mxu0 %v532
    %v534 = vand.u32 %v43, 4294901760
    %v535 = vsub.f32 %v43, %v534
    %536 = vmatprep.subr.mxu0 %v535
    %v537 = vand.u32 %v42, 4294901760
    %v538 = vsub.f32 %v42, %v537
    %539 = vmatpush1.msra.mxu0 %v538
    %v540 = vand.u32 %v39, 4294901760
    %v541 = vsub.f32 %v39, %v540
    %542 = vmatprep.subr.mxu0 %v541
    %v543 = vand.u32 %v38, 4294901760
    %v544 = vsub.f32 %v38, %v543
    %545 = vmatpush1.msra.mxu0 %v544
    %v546 = vand.u32 %v35, 4294901760
    %v547 = vsub.f32 %v35, %v546
    %548 = vmatprep.subr.mxu0 %v547
    %v549 = vand.u32 %v34, 4294901760
    %v550 = vsub.f32 %v34, %v549
    %551 = vmatpush1.msra.mxu0 %v550
    %552 = vmatprep.subr.mxu0 0.0
    %553 = vmatpush2.msra.mxu0 0.0
    %554 = vmatprep.subr.mxu0 0.0
    %555 = vmatpush2.msra.mxu0 0.0
    %556 = vmatprep.subr.mxu0 0.0
    %557 = vmatpush2.msra.mxu0 0.0
    %558 = vmatprep.subr.mxu0 0.0
    %559 = vmatpush2.msra.mxu0 0.0
    %560 = vmatprep.subr.mxu0 0.0
    %561 = vmatpush2.msra.mxu0 0.0
    %562 = vmatprep.subr.mxu0 0.0
    %563 = vmatpush2.msra.mxu0 0.0
    %564 = vmatprep.subr.mxu0 0.0
    %565 = vmatpush2.msra.mxu0 0.0
    %566 = vmatprep.subr.mxu0 0.0
    %567 = vmatpush2.msra.mxu0 0.0
    %568 = vmatprep.subr.mxu0 0.0
    %569 = vmatpush2.msra.mxu0 0.0
    %570 = vmatprep.subr.mxu0 0.0
    %571 = vmatpush2.msra.mxu0 0.0
    %572 = vmatprep.subr.mxu0 0.0
    %573 = vmatpush2.msra.mxu0 0.0
    %574 = vmatprep.subr.mxu0 0.0
    %575 = vmatpush2.msra.mxu0 0.0
    %576 = vmatprep.subr.mxu0 0.0
    %577 = vmatpush2.msra.mxu0 0.0
    %578 = vmatprep.subr.mxu0 0.0
    %579 = vmatpush2.msra.mxu0 0.0
    %580 = vmatprep.subr.mxu0 0.0
    %581 = vmatpush2.msra.mxu0 0.0
    %582 = vmatprep.subr.mxu0 0.0
    %583 = vmatpush2.msra.mxu0 0.0
    %584 = vmatprep.mubr.f32.mxu0 0.0
    %v585 = vand.u32 %v28, 4294901760
    %v586 = vsub.f32 %v28, %v585
    %587 = vmatmul.mubr.f32.gmra.mxu0 %v586
    %v588 = vpop.f32.mrf.mxu0
    %v589 = vadd.f32 %v445, %v588
    %v590 = vpop.f32.mrf.mxu0
    %v591 = vadd.f32 %v447, %v590
    %592 = vmatprep.mubr.f32.mxu0 0.0
    %v593 = vand.u32 %v29, 4294901760
    %v594 = vsub.f32 %v29, %v593
    %595 = vmatmul.mubr.f32.gmra.mxu0 %v594
    %v596 = vpop.f32.mrf.mxu0
    %v597 = vadd.f32 %v452, %v596
    %v598 = vpop.f32.mrf.mxu0
    %v599 = vadd.f32 %v454, %v598
    %600 = vdwg.mxu0
    %v601 = vand.u32 %v95, 4294901760
    %602 = vmatprep.subr.mxu0 %v601
    %v603 = vand.u32 %v94, 4294901760
    %604 = vmatpush1.msra.mxu0 %v603
    %v605 = vand.u32 %v91, 4294901760
    %606 = vmatprep.subr.mxu0 %v605
    %v607 = vand.u32 %v90, 4294901760
    %608 = vmatpush1.msra.mxu0 %v607
    %v609 = vand.u32 %v87, 4294901760
    %610 = vmatprep.subr.mxu0 %v609
    %v611 = vand.u32 %v86, 4294901760
    %612 = vmatpush1.msra.mxu0 %v611
    %v613 = vand.u32 %v83, 4294901760
    %614 = vmatprep.subr.mxu0 %v613
    %v615 = vand.u32 %v82, 4294901760
    %616 = vmatpush1.msra.mxu0 %v615
    %v617 = vand.u32 %v79, 4294901760
    %618 = vmatprep.subr.mxu0 %v617
    %v619 = vand.u32 %v78, 4294901760
    %620 = vmatpush1.msra.mxu0 %v619
    %v621 = vand.u32 %v75, 4294901760
    %622 = vmatprep.subr.mxu0 %v621
    %v623 = vand.u32 %v74, 4294901760
    %624 = vmatpush1.msra.mxu0 %v623
    %v625 = vand.u32 %v71, 4294901760
    %626 = vmatprep.subr.mxu0 %v625
    %v627 = vand.u32 %v70, 4294901760
    %628 = vmatpush1.msra.mxu0 %v627
    %v629 = vand.u32 %v67, 4294901760
    %630 = vmatprep.subr.mxu0 %v629
    %v631 = vand.u32 %v66, 4294901760
    %632 = vmatpush1.msra.mxu0 %v631
    %v633 = vand.u32 %v63, 4294901760
    %634 = vmatprep.subr.mxu0 %v633
    %v635 = vand.u32 %v62, 4294901760
    %636 = vmatpush1.msra.mxu0 %v635
    %v637 = vand.u32 %v59, 4294901760
    %638 = vmatprep.subr.mxu0 %v637
    %v639 = vand.u32 %v58, 4294901760
    %640 = vmatpush1.msra.mxu0 %v639
    %v641 = vand.u32 %v55, 4294901760
    %642 = vmatprep.subr.mxu0 %v641
    %v643 = vand.u32 %v54, 4294901760
    %644 = vmatpush1.msra.mxu0 %v643
    %v645 = vand.u32 %v51, 4294901760
    %646 = vmatprep.subr.mxu0 %v645
    %v647 = vand.u32 %v50, 4294901760
    %648 = vmatpush1.msra.mxu0 %v647
    %v649 = vand.u32 %v47, 4294901760
    %650 = vmatprep.subr.mxu0 %v649
    %v651 = vand.u32 %v46, 4294901760
    %652 = vmatpush1.msra.mxu0 %v651
    %v653 = vand.u32 %v43, 4294901760
    %654 = vmatprep.subr.mxu0 %v653
    %v655 = vand.u32 %v42, 4294901760
    %656 = vmatpush1.msra.mxu0 %v655
    %v657 = vand.u32 %v39, 4294901760
    %658 = vmatprep.subr.mxu0 %v657
    %v659 = vand.u32 %v38, 4294901760
    %660 = vmatpush1.msra.mxu0 %v659
    %v661 = vand.u32 %v35, 4294901760
    %662 = vmatprep.subr.mxu0 %v661
    %v663 = vand.u32 %v34, 4294901760
    %664 = vmatpush1.msra.mxu0 %v663
    %665 = vmatprep.subr.mxu0 0.0
    %666 = vmatpush2.msra.mxu0 0.0
    %667 = vmatprep.subr.mxu0 0.0
    %668 = vmatpush2.msra.mxu0 0.0
    %669 = vmatprep.subr.mxu0 0.0
    %670 = vmatpush2.msra.mxu0 0.0
    %671 = vmatprep.subr.mxu0 0.0
    %672 = vmatpush2.msra.mxu0 0.0
    %673 = vmatprep.subr.mxu0 0.0
    %674 = vmatpush2.msra.mxu0 0.0
    %675 = vmatprep.subr.mxu0 0.0
    %676 = vmatpush2.msra.mxu0 0.0
    %677 = vmatprep.subr.mxu0 0.0
    %678 = vmatpush2.msra.mxu0 0.0
    %679 = vmatprep.subr.mxu0 0.0
    %680 = vmatpush2.msra.mxu0 0.0
    %681 = vmatprep.subr.mxu0 0.0
    %682 = vmatpush2.msra.mxu0 0.0
    %683 = vmatprep.subr.mxu0 0.0
    %684 = vmatpush2.msra.mxu0 0.0
    %685 = vmatprep.subr.mxu0 0.0
    %686 = vmatpush2.msra.mxu0 0.0
    %687 = vmatprep.subr.mxu0 0.0
    %688 = vmatpush2.msra.mxu0 0.0
    %689 = vmatprep.subr.mxu0 0.0
    %690 = vmatpush2.msra.mxu0 0.0
    %691 = vmatprep.subr.mxu0 0.0
    %692 = vmatpush2.msra.mxu0 0.0
    %693 = vmatprep.subr.mxu0 0.0
    %694 = vmatpush2.msra.mxu0 0.0
    %695 = vmatprep.subr.mxu0 0.0
    %696 = vmatpush2.msra.mxu0 0.0
    %697 = vmatprep.mubr.f32.mxu0 0.0
    %v698 = vand.u32 %v28, 4294901760
    %v699 = vsub.f32 %v28, %v698
    %v700 = vand.u32 %v699, 4294901760
    %701 = vmatmul.mubr.f32.gmra.mxu0 %v700
    %v702 = vpop.f32.mrf.mxu0
    %v703 = vadd.f32 %v589, %v702
    %v704 = vpop.f32.mrf.mxu0
    %v705 = vadd.f32 %v591, %v704
    %706 = vmatprep.mubr.f32.mxu0 0.0
    %v707 = vand.u32 %v29, 4294901760
    %v708 = vsub.f32 %v29, %v707
    %v709 = vand.u32 %v708, 4294901760
    %710 = vmatmul.mubr.f32.gmra.mxu0 %v709
    %v711 = vpop.f32.mrf.mxu0
    %v712 = vadd.f32 %v597, %v711
    %v713 = vpop.f32.mrf.mxu0
    %v714 = vadd.f32 %v599, %v713
    %715 = vdwg.mxu0
    %v716 = vand.u32 %v95, 4294901760
    %v717 = vsub.f32 %v95, %v716
    %v718 = vand.u32 %v717, 4294901760
    %719 = vmatprep.subr.mxu0 %v718
    %v720 = vand.u32 %v94, 4294901760
    %v721 = vsub.f32 %v94, %v720
    %v722 = vand.u32 %v721, 4294901760
    %723 = vmatpush1.msra.mxu0 %v722
    %v724 = vand.u32 %v91, 4294901760
    %v725 = vsub.f32 %v91, %v724
    %v726 = vand.u32 %v725, 4294901760
    %727 = vmatprep.subr.mxu0 %v726
    %v728 = vand.u32 %v90, 4294901760
    %v729 = vsub.f32 %v90, %v728
    %v730 = vand.u32 %v729, 4294901760
    %731 = vmatpush1.msra.mxu0 %v730
    %v732 = vand.u32 %v87, 4294901760
    %v733 = vsub.f32 %v87, %v732
    %v734 = vand.u32 %v733, 4294901760
    %735 = vmatprep.subr.mxu0 %v734
    %v736 = vand.u32 %v86, 4294901760
    %v737 = vsub.f32 %v86, %v736
    %v738 = vand.u32 %v737, 4294901760
    %739 = vmatpush1.msra.mxu0 %v738
    %v740 = vand.u32 %v83, 4294901760
    %v741 = vsub.f32 %v83, %v740
    %v742 = vand.u32 %v741, 4294901760
    %743 = vmatprep.subr.mxu0 %v742
    %v744 = vand.u32 %v82, 4294901760
    %v745 = vsub.f32 %v82, %v744
    %v746 = vand.u32 %v745, 4294901760
    %747 = vmatpush1.msra.mxu0 %v746
    %v748 = vand.u32 %v79, 4294901760
    %v749 = vsub.f32 %v79, %v748
    %v750 = vand.u32 %v749, 4294901760
    %751 = vmatprep.subr.mxu0 %v750
    %v752 = vand.u32 %v78, 4294901760
    %v753 = vsub.f32 %v78, %v752
    %v754 = vand.u32 %v753, 4294901760
    %755 = vmatpush1.msra.mxu0 %v754
    %v756 = vand.u32 %v75, 4294901760
    %v757 = vsub.f32 %v75, %v756
    %v758 = vand.u32 %v757, 4294901760
    %759 = vmatprep.subr.mxu0 %v758
    %v760 = vand.u32 %v74, 4294901760
    %v761 = vsub.f32 %v74, %v760
    %v762 = vand.u32 %v761, 4294901760
    %763 = vmatpush1.msra.mxu0 %v762
    %v764 = vand.u32 %v71, 4294901760
    %v765 = vsub.f32 %v71, %v764
    %v766 = vand.u32 %v765, 4294901760
    %767 = vmatprep.subr.mxu0 %v766
    %v768 = vand.u32 %v70, 4294901760
    %v769 = vsub.f32 %v70, %v768
    %v770 = vand.u32 %v769, 4294901760
    %771 = vmatpush1.msra.mxu0 %v770
    %v772 = vand.u32 %v67, 4294901760
    %v773 = vsub.f32 %v67, %v772
    %v774 = vand.u32 %v773, 4294901760
    %775 = vmatprep.subr.mxu0 %v774
    %v776 = vand.u32 %v66, 4294901760
    %v777 = vsub.f32 %v66, %v776
    %v778 = vand.u32 %v777, 4294901760
    %779 = vmatpush1.msra.mxu0 %v778
    %v780 = vand.u32 %v63, 4294901760
    %v781 = vsub.f32 %v63, %v780
    %v782 = vand.u32 %v781, 4294901760
    %783 = vmatprep.subr.mxu0 %v782
    %v784 = vand.u32 %v62, 4294901760
    %v785 = vsub.f32 %v62, %v784
    %v786 = vand.u32 %v785, 4294901760
    %787 = vmatpush1.msra.mxu0 %v786
    %v788 = vand.u32 %v59, 4294901760
    %v789 = vsub.f32 %v59, %v788
    %v790 = vand.u32 %v789, 4294901760
    %791 = vmatprep.subr.mxu0 %v790
    %v792 = vand.u32 %v58, 4294901760
    %v793 = vsub.f32 %v58, %v792
    %v794 = vand.u32 %v793, 4294901760
    %795 = vmatpush1.msra.mxu0 %v794
    %v796 = vand.u32 %v55, 4294901760
    %v797 = vsub.f32 %v55, %v796
    %v798 = vand.u32 %v797, 4294901760
    %799 = vmatprep.subr.mxu0 %v798
    %v800 = vand.u32 %v54, 4294901760
    %v801 = vsub.f32 %v54, %v800
    %v802 = vand.u32 %v801, 4294901760
    %803 = vmatpush1.msra.mxu0 %v802
    %v804 = vand.u32 %v51, 4294901760
    %v805 = vsub.f32 %v51, %v804
    %v806 = vand.u32 %v805, 4294901760
    %807 = vmatprep.subr.mxu0 %v806
    %v808 = vand.u32 %v50, 4294901760
    %v809 = vsub.f32 %v50, %v808
    %v810 = vand.u32 %v809, 4294901760
    %811 = vmatpush1.msra.mxu0 %v810
    %v812 = vand.u32 %v47, 4294901760
    %v813 = vsub.f32 %v47, %v812
    %v814 = vand.u32 %v813, 4294901760
    %815 = vmatprep.subr.mxu0 %v814
    %v816 = vand.u32 %v46, 4294901760
    %v817 = vsub.f32 %v46, %v816
    %v818 = vand.u32 %v817, 4294901760
    %819 = vmatpush1.msra.mxu0 %v818
    %v820 = vand.u32 %v43, 4294901760
    %v821 = vsub.f32 %v43, %v820
    %v822 = vand.u32 %v821, 4294901760
    %823 = vmatprep.subr.mxu0 %v822
    %v824 = vand.u32 %v42, 4294901760
    %v825 = vsub.f32 %v42, %v824
    %v826 = vand.u32 %v825, 4294901760
    %827 = vmatpush1.msra.mxu0 %v826
    %v828 = vand.u32 %v39, 4294901760
    %v829 = vsub.f32 %v39, %v828
    %v830 = vand.u32 %v829, 4294901760
    %831 = vmatprep.subr.mxu0 %v830
    %v832 = vand.u32 %v38, 4294901760
    %v833 = vsub.f32 %v38, %v832
    %v834 = vand.u32 %v833, 4294901760
    %835 = vmatpush1.msra.mxu0 %v834
    %v836 = vand.u32 %v35, 4294901760
    %v837 = vsub.f32 %v35, %v836
    %v838 = vand.u32 %v837, 4294901760
    %839 = vmatprep.subr.mxu0 %v838
    %v840 = vand.u32 %v34, 4294901760
    %v841 = vsub.f32 %v34, %v840
    %v842 = vand.u32 %v841, 4294901760
    %843 = vmatpush1.msra.mxu0 %v842
    %844 = vmatprep.subr.mxu0 0.0
    %845 = vmatpush2.msra.mxu0 0.0
    %846 = vmatprep.subr.mxu0 0.0
    %847 = vmatpush2.msra.mxu0 0.0
    %848 = vmatprep.subr.mxu0 0.0
    %849 = vmatpush2.msra.mxu0 0.0
    %850 = vmatprep.subr.mxu0 0.0
    %851 = vmatpush2.msra.mxu0 0.0
    %852 = vmatprep.subr.mxu0 0.0
    %853 = vmatpush2.msra.mxu0 0.0
    %854 = vmatprep.subr.mxu0 0.0
    %855 = vmatpush2.msra.mxu0 0.0
    %856 = vmatprep.subr.mxu0 0.0
    %857 = vmatpush2.msra.mxu0 0.0
    %858 = vmatprep.subr.mxu0 0.0
    %859 = vmatpush2.msra.mxu0 0.0
    %860 = vmatprep.subr.mxu0 0.0
    %861 = vmatpush2.msra.mxu0 0.0
    %862 = vmatprep.subr.mxu0 0.0
    %863 = vmatpush2.msra.mxu0 0.0
    %864 = vmatprep.subr.mxu0 0.0
    %865 = vmatpush2.msra.mxu0 0.0
    %866 = vmatprep.subr.mxu0 0.0
    %867 = vmatpush2.msra.mxu0 0.0
    %868 = vmatprep.subr.mxu0 0.0
    %869 = vmatpush2.msra.mxu0 0.0
    %870 = vmatprep.subr.mxu0 0.0
    %871 = vmatpush2.msra.mxu0 0.0
    %872 = vmatprep.subr.mxu0 0.0
    %873 = vmatpush2.msra.mxu0 0.0
    %874 = vmatprep.subr.mxu0 0.0
    %875 = vmatpush2.msra.mxu0 0.0
    %876 = vmatprep.mubr.f32.mxu0 0.0
    %v877 = vand.u32 %v28, 4294901760
    %878 = vmatmul.mubr.f32.gmra.mxu0 %v877
    %v879 = vpop.f32.mrf.mxu0
    %v880 = vadd.f32 %v703, %v879
    %v881 = vpop.f32.mrf.mxu0
    %v882 = vadd.f32 %v705, %v881
    %883 = vmatprep.mubr.f32.mxu0 0.0
    %v884 = vand.u32 %v29, 4294901760
    %885 = vmatmul.mubr.f32.gmra.mxu0 %v884
    %v886 = vpop.f32.mrf.mxu0
    %v887 = vadd.f32 %v712, %v886
    %v888 = vpop.f32.mrf.mxu0
    %v889 = vadd.f32 %v714, %v888
    %890 = vdwg.mxu0
    %v891 = vand.u32 %v95, 4294901760
    %892 = vmatprep.subr.mxu0 %v891
    %v893 = vand.u32 %v94, 4294901760
    %894 = vmatpush1.msra.mxu0 %v893
    %v895 = vand.u32 %v91, 4294901760
    %896 = vmatprep.subr.mxu0 %v895
    %v897 = vand.u32 %v90, 4294901760
    %898 = vmatpush1.msra.mxu0 %v897
    %v899 = vand.u32 %v87, 4294901760
    %900 = vmatprep.subr.mxu0 %v899
    %v901 = vand.u32 %v86, 4294901760
    %902 = vmatpush1.msra.mxu0 %v901
    %v903 = vand.u32 %v83, 4294901760
    %904 = vmatprep.subr.mxu0 %v903
    %v905 = vand.u32 %v82, 4294901760
    %906 = vmatpush1.msra.mxu0 %v905
    %v907 = vand.u32 %v79, 4294901760
    %908 = vmatprep.subr.mxu0 %v907
    %v909 = vand.u32 %v78, 4294901760
    %910 = vmatpush1.msra.mxu0 %v909
    %v911 = vand.u32 %v75, 4294901760
    %912 = vmatprep.subr.mxu0 %v911
    %v913 = vand.u32 %v74, 4294901760
    %914 = vmatpush1.msra.mxu0 %v913
    %v915 = vand.u32 %v71, 4294901760
    %916 = vmatprep.subr.mxu0 %v915
    %v917 = vand.u32 %v70, 4294901760
    %918 = vmatpush1.msra.mxu0 %v917
    %v919 = vand.u32 %v67, 4294901760
    %920 = vmatprep.subr.mxu0 %v919
    %v921 = vand.u32 %v66, 4294901760
    %922 = vmatpush1.msra.mxu0 %v921
    %v923 = vand.u32 %v63, 4294901760
    %924 = vmatprep.subr.mxu0 %v923
    %v925 = vand.u32 %v62, 4294901760
    %926 = vmatpush1.msra.mxu0 %v925
    %v927 = vand.u32 %v59, 4294901760
    %928 = vmatprep.subr.mxu0 %v927
    %v929 = vand.u32 %v58, 4294901760
    %930 = vmatpush1.msra.mxu0 %v929
    %v931 = vand.u32 %v55, 4294901760
    %932 = vmatprep.subr.mxu0 %v931
    %v933 = vand.u32 %v54, 4294901760
    %934 = vmatpush1.msra.mxu0 %v933
    %v935 = vand.u32 %v51, 4294901760
    %936 = vmatprep.subr.mxu0 %v935
    %v937 = vand.u32 %v50, 4294901760
    %938 = vmatpush1.msra.mxu0 %v937
    %v939 = vand.u32 %v47, 4294901760
    %940 = vmatprep.subr.mxu0 %v939
    %v941 = vand.u32 %v46, 4294901760
    %942 = vmatpush1.msra.mxu0 %v941
    %v943 = vand.u32 %v43, 4294901760
    %944 = vmatprep.subr.mxu0 %v943
    %v945 = vand.u32 %v42, 4294901760
    %946 = vmatpush1.msra.mxu0 %v945
    %v947 = vand.u32 %v39, 4294901760
    %948 = vmatprep.subr.mxu0 %v947
    %v949 = vand.u32 %v38, 4294901760
    %950 = vmatpush1.msra.mxu0 %v949
    %v951 = vand.u32 %v35, 4294901760
    %952 = vmatprep.subr.mxu0 %v951
    %v953 = vand.u32 %v34, 4294901760
    %954 = vmatpush1.msra.mxu0 %v953
    %955 = vmatprep.subr.mxu0 0.0
    %956 = vmatpush2.msra.mxu0 0.0
    %957 = vmatprep.subr.mxu0 0.0
    %958 = vmatpush2.msra.mxu0 0.0
    %959 = vmatprep.subr.mxu0 0.0
    %960 = vmatpush2.msra.mxu0 0.0
    %961 = vmatprep.subr.mxu0 0.0
    %962 = vmatpush2.msra.mxu0 0.0
    %963 = vmatprep.subr.mxu0 0.0
    %964 = vmatpush2.msra.mxu0 0.0
    %965 = vmatprep.subr.mxu0 0.0
    %966 = vmatpush2.msra.mxu0 0.0
    %967 = vmatprep.subr.mxu0 0.0
    %968 = vmatpush2.msra.mxu0 0.0
    %969 = vmatprep.subr.mxu0 0.0
    %970 = vmatpush2.msra.mxu0 0.0
    %971 = vmatprep.subr.mxu0 0.0
    %972 = vmatpush2.msra.mxu0 0.0
    %973 = vmatprep.subr.mxu0 0.0
    %974 = vmatpush2.msra.mxu0 0.0
    %975 = vmatprep.subr.mxu0 0.0
    %976 = vmatpush2.msra.mxu0 0.0
    %977 = vmatprep.subr.mxu0 0.0
    %978 = vmatpush2.msra.mxu0 0.0
    %979 = vmatprep.subr.mxu0 0.0
    %980 = vmatpush2.msra.mxu0 0.0
    %981 = vmatprep.subr.mxu0 0.0
    %982 = vmatpush2.msra.mxu0 0.0
    %983 = vmatprep.subr.mxu0 0.0
    %984 = vmatpush2.msra.mxu0 0.0
    %985 = vmatprep.subr.mxu0 0.0
    %986 = vmatpush2.msra.mxu0 0.0
    %987 = vmatprep.mubr.f32.mxu0 0.0
    %v988 = vand.u32 %v28, 4294901760
    %989 = vmatmul.mubr.f32.gmra.mxu0 %v988
    %v990 = vpop.f32.mrf.mxu0
    %v991 = vadd.f32 %v880, %v990
    %v992 = vpop.f32.mrf.mxu0
    %v993 = vadd.f32 %v882, %v992
    %994 = vmatprep.mubr.f32.mxu0 0.0
    %v995 = vand.u32 %v29, 4294901760
    %996 = vmatmul.mubr.f32.gmra.mxu0 %v995
    %v997 = vpop.f32.mrf.mxu0
    %v998 = vadd.f32 %v887, %v997
    %v999 = vpop.f32.mrf.mxu0
    %v1000 = vadd.f32 %v889, %v999
    %1001 = vdwg.mxu0
    %v1002 = vand.u32 %v97, 4294901760
    %1003 = vmatprep.subr.mxu0 %v1002
    %v1004 = vand.u32 %v96, 4294901760
    %1005 = vmatpush1.msra.mxu0 %v1004
    %v1006 = vand.u32 %v93, 4294901760
    %1007 = vmatprep.subr.mxu0 %v1006
    %v1008 = vand.u32 %v92, 4294901760
    %1009 = vmatpush1.msra.mxu0 %v1008
    %v1010 = vand.u32 %v89, 4294901760
    %1011 = vmatprep.subr.mxu0 %v1010
    %v1012 = vand.u32 %v88, 4294901760
    %1013 = vmatpush1.msra.mxu0 %v1012
    %v1014 = vand.u32 %v85, 4294901760
    %1015 = vmatprep.subr.mxu0 %v1014
    %v1016 = vand.u32 %v84, 4294901760
    %1017 = vmatpush1.msra.mxu0 %v1016
    %v1018 = vand.u32 %v81, 4294901760
    %1019 = vmatprep.subr.mxu0 %v1018
    %v1020 = vand.u32 %v80, 4294901760
    %1021 = vmatpush1.msra.mxu0 %v1020
    %v1022 = vand.u32 %v77, 4294901760
    %1023 = vmatprep.subr.mxu0 %v1022
    %v1024 = vand.u32 %v76, 4294901760
    %1025 = vmatpush1.msra.mxu0 %v1024
    %v1026 = vand.u32 %v73, 4294901760
    %1027 = vmatprep.subr.mxu0 %v1026
    %v1028 = vand.u32 %v72, 4294901760
    %1029 = vmatpush1.msra.mxu0 %v1028
    %v1030 = vand.u32 %v69, 4294901760
    %1031 = vmatprep.subr.mxu0 %v1030
    %v1032 = vand.u32 %v68, 4294901760
    %1033 = vmatpush1.msra.mxu0 %v1032
    %v1034 = vand.u32 %v65, 4294901760
    %1035 = vmatprep.subr.mxu0 %v1034
    %v1036 = vand.u32 %v64, 4294901760
    %1037 = vmatpush1.msra.mxu0 %v1036
    %v1038 = vand.u32 %v61, 4294901760
    %1039 = vmatprep.subr.mxu0 %v1038
    %v1040 = vand.u32 %v60, 4294901760
    %1041 = vmatpush1.msra.mxu0 %v1040
    %v1042 = vand.u32 %v57, 4294901760
    %1043 = vmatprep.subr.mxu0 %v1042
    %v1044 = vand.u32 %v56, 4294901760
    %1045 = vmatpush1.msra.mxu0 %v1044
    %v1046 = vand.u32 %v53, 4294901760
    %1047 = vmatprep.subr.mxu0 %v1046
    %v1048 = vand.u32 %v52, 4294901760
    %1049 = vmatpush1.msra.mxu0 %v1048
    %v1050 = vand.u32 %v49, 4294901760
    %1051 = vmatprep.subr.mxu0 %v1050
    %v1052 = vand.u32 %v48, 4294901760
    %1053 = vmatpush1.msra.mxu0 %v1052
    %v1054 = vand.u32 %v45, 4294901760
    %1055 = vmatprep.subr.mxu0 %v1054
    %v1056 = vand.u32 %v44, 4294901760
    %1057 = vmatpush1.msra.mxu0 %v1056
    %v1058 = vand.u32 %v41, 4294901760
    %1059 = vmatprep.subr.mxu0 %v1058
    %v1060 = vand.u32 %v40, 4294901760
    %1061 = vmatpush1.msra.mxu0 %v1060
    %v1062 = vand.u32 %v37, 4294901760
    %1063 = vmatprep.subr.mxu0 %v1062
    %v1064 = vand.u32 %v36, 4294901760
    %1065 = vmatpush1.msra.mxu0 %v1064
    %1066 = vmatprep.subr.mxu0 0.0
    %1067 = vmatpush2.msra.mxu0 0.0
    %1068 = vmatprep.subr.mxu0 0.0
    %1069 = vmatpush2.msra.mxu0 0.0
    %1070 = vmatprep.subr.mxu0 0.0
    %1071 = vmatpush2.msra.mxu0 0.0
    %1072 = vmatprep.subr.mxu0 0.0
    %1073 = vmatpush2.msra.mxu0 0.0
    %1074 = vmatprep.subr.mxu0 0.0
    %1075 = vmatpush2.msra.mxu0 0.0
    %1076 = vmatprep.subr.mxu0 0.0
    %1077 = vmatpush2.msra.mxu0 0.0
    %1078 = vmatprep.subr.mxu0 0.0
    %1079 = vmatpush2.msra.mxu0 0.0
    %1080 = vmatprep.subr.mxu0 0.0
    %1081 = vmatpush2.msra.mxu0 0.0
    %1082 = vmatprep.subr.mxu0 0.0
    %1083 = vmatpush2.msra.mxu0 0.0
    %1084 = vmatprep.subr.mxu0 0.0
    %1085 = vmatpush2.msra.mxu0 0.0
    %1086 = vmatprep.subr.mxu0 0.0
    %1087 = vmatpush2.msra.mxu0 0.0
    %1088 = vmatprep.subr.mxu0 0.0
    %1089 = vmatpush2.msra.mxu0 0.0
    %1090 = vmatprep.subr.mxu0 0.0
    %1091 = vmatpush2.msra.mxu0 0.0
    %1092 = vmatprep.subr.mxu0 0.0
    %1093 = vmatpush2.msra.mxu0 0.0
    %1094 = vmatprep.subr.mxu0 0.0
    %1095 = vmatpush2.msra.mxu0 0.0
    %1096 = vmatprep.subr.mxu0 0.0
    %1097 = vmatpush2.msra.mxu0 0.0
    %1098 = vmatprep.mubr.f32.mxu0 0.0
    %v1099 = vand.u32 %v28, 4294901760
    %v1100 = vsub.f32 %v28, %v1099
    %v1101 = vand.u32 %v1100, 4294901760
    %v1102 = vsub.f32 %v1100, %v1101
    %v1103 = vand.u32 %v1102, 4294901760
    %1104 = vmatmul.mubr.f32.gmra.mxu0 %v1103
    %v1105 = vpop.f32.mrf.mxu0
    %v1106 = vadd.f32 0.0, %v1105
    %v1107 = vpop.f32.mrf.mxu0
    %v1108 = vadd.f32 0.0, %v1107
    %1109 = vmatprep.mubr.f32.mxu0 0.0
    %v1110 = vand.u32 %v29, 4294901760
    %v1111 = vsub.f32 %v29, %v1110
    %v1112 = vand.u32 %v1111, 4294901760
    %v1113 = vsub.f32 %v1111, %v1112
    %v1114 = vand.u32 %v1113, 4294901760
    %1115 = vmatmul.mubr.f32.gmra.mxu0 %v1114
    %v1116 = vpop.f32.mrf.mxu0
    %v1117 = vadd.f32 0.0, %v1116
    %v1118 = vpop.f32.mrf.mxu0
    %v1119 = vadd.f32 0.0, %v1118
    %1120 = vdwg.mxu0
    %v1121 = vand.u32 %v97, 4294901760
    %v1122 = vsub.f32 %v97, %v1121
    %v1123 = vand.u32 %v1122, 4294901760
    %v1124 = vsub.f32 %v1122, %v1123
    %v1125 = vand.u32 %v1124, 4294901760
    %1126 = vmatprep.subr.mxu0 %v1125
    %v1127 = vand.u32 %v96, 4294901760
    %v1128 = vsub.f32 %v96, %v1127
    %v1129 = vand.u32 %v1128, 4294901760
    %v1130 = vsub.f32 %v1128, %v1129
    %v1131 = vand.u32 %v1130, 4294901760
    %1132 = vmatpush1.msra.mxu0 %v1131
    %v1133 = vand.u32 %v93, 4294901760
    %v1134 = vsub.f32 %v93, %v1133
    %v1135 = vand.u32 %v1134, 4294901760
    %v1136 = vsub.f32 %v1134, %v1135
    %v1137 = vand.u32 %v1136, 4294901760
    %1138 = vmatprep.subr.mxu0 %v1137
    %v1139 = vand.u32 %v92, 4294901760
    %v1140 = vsub.f32 %v92, %v1139
    %v1141 = vand.u32 %v1140, 4294901760
    %v1142 = vsub.f32 %v1140, %v1141
    %v1143 = vand.u32 %v1142, 4294901760
    %1144 = vmatpush1.msra.mxu0 %v1143
    %v1145 = vand.u32 %v89, 4294901760
    %v1146 = vsub.f32 %v89, %v1145
    %v1147 = vand.u32 %v1146, 4294901760
    %v1148 = vsub.f32 %v1146, %v1147
    %v1149 = vand.u32 %v1148, 4294901760
    %1150 = vmatprep.subr.mxu0 %v1149
    %v1151 = vand.u32 %v88, 4294901760
    %v1152 = vsub.f32 %v88, %v1151
    %v1153 = vand.u32 %v1152, 4294901760
    %v1154 = vsub.f32 %v1152, %v1153
    %v1155 = vand.u32 %v1154, 4294901760
    %1156 = vmatpush1.msra.mxu0 %v1155
    %v1157 = vand.u32 %v85, 4294901760
    %v1158 = vsub.f32 %v85, %v1157
    %v1159 = vand.u32 %v1158, 4294901760
    %v1160 = vsub.f32 %v1158, %v1159
    %v1161 = vand.u32 %v1160, 4294901760
    %1162 = vmatprep.subr.mxu0 %v1161
    %v1163 = vand.u32 %v84, 4294901760
    %v1164 = vsub.f32 %v84, %v1163
    %v1165 = vand.u32 %v1164, 4294901760
    %v1166 = vsub.f32 %v1164, %v1165
    %v1167 = vand.u32 %v1166, 4294901760
    %1168 = vmatpush1.msra.mxu0 %v1167
    %v1169 = vand.u32 %v81, 4294901760
    %v1170 = vsub.f32 %v81, %v1169
    %v1171 = vand.u32 %v1170, 4294901760
    %v1172 = vsub.f32 %v1170, %v1171
    %v1173 = vand.u32 %v1172, 4294901760
    %1174 = vmatprep.subr.mxu0 %v1173
    %v1175 = vand.u32 %v80, 4294901760
    %v1176 = vsub.f32 %v80, %v1175
    %v1177 = vand.u32 %v1176, 4294901760
    %v1178 = vsub.f32 %v1176, %v1177
    %v1179 = vand.u32 %v1178, 4294901760
    %1180 = vmatpush1.msra.mxu0 %v1179
    %v1181 = vand.u32 %v77, 4294901760
    %v1182 = vsub.f32 %v77, %v1181
    %v1183 = vand.u32 %v1182, 4294901760
    %v1184 = vsub.f32 %v1182, %v1183
    %v1185 = vand.u32 %v1184, 4294901760
    %1186 = vmatprep.subr.mxu0 %v1185
    %v1187 = vand.u32 %v76, 4294901760
    %v1188 = vsub.f32 %v76, %v1187
    %v1189 = vand.u32 %v1188, 4294901760
    %v1190 = vsub.f32 %v1188, %v1189
    %v1191 = vand.u32 %v1190, 4294901760
    %1192 = vmatpush1.msra.mxu0 %v1191
    %v1193 = vand.u32 %v73, 4294901760
    %v1194 = vsub.f32 %v73, %v1193
    %v1195 = vand.u32 %v1194, 4294901760
    %v1196 = vsub.f32 %v1194, %v1195
    %v1197 = vand.u32 %v1196, 4294901760
    %1198 = vmatprep.subr.mxu0 %v1197
    %v1199 = vand.u32 %v72, 4294901760
    %v1200 = vsub.f32 %v72, %v1199
    %v1201 = vand.u32 %v1200, 4294901760
    %v1202 = vsub.f32 %v1200, %v1201
    %v1203 = vand.u32 %v1202, 4294901760
    %1204 = vmatpush1.msra.mxu0 %v1203
    %v1205 = vand.u32 %v69, 4294901760
    %v1206 = vsub.f32 %v69, %v1205
    %v1207 = vand.u32 %v1206, 4294901760
    %v1208 = vsub.f32 %v1206, %v1207
    %v1209 = vand.u32 %v1208, 4294901760
    %1210 = vmatprep.subr.mxu0 %v1209
    %v1211 = vand.u32 %v68, 4294901760
    %v1212 = vsub.f32 %v68, %v1211
    %v1213 = vand.u32 %v1212, 4294901760
    %v1214 = vsub.f32 %v1212, %v1213
    %v1215 = vand.u32 %v1214, 4294901760
    %1216 = vmatpush1.msra.mxu0 %v1215
    %v1217 = vand.u32 %v65, 4294901760
    %v1218 = vsub.f32 %v65, %v1217
    %v1219 = vand.u32 %v1218, 4294901760
    %v1220 = vsub.f32 %v1218, %v1219
    %v1221 = vand.u32 %v1220, 4294901760
    %1222 = vmatprep.subr.mxu0 %v1221
    %v1223 = vand.u32 %v64, 4294901760
    %v1224 = vsub.f32 %v64, %v1223
    %v1225 = vand.u32 %v1224, 4294901760
    %v1226 = vsub.f32 %v1224, %v1225
    %v1227 = vand.u32 %v1226, 4294901760
    %1228 = vmatpush1.msra.mxu0 %v1227
    %v1229 = vand.u32 %v61, 4294901760
    %v1230 = vsub.f32 %v61, %v1229
    %v1231 = vand.u32 %v1230, 4294901760
    %v1232 = vsub.f32 %v1230, %v1231
    %v1233 = vand.u32 %v1232, 4294901760
    %1234 = vmatprep.subr.mxu0 %v1233
    %v1235 = vand.u32 %v60, 4294901760
    %v1236 = vsub.f32 %v60, %v1235
    %v1237 = vand.u32 %v1236, 4294901760
    %v1238 = vsub.f32 %v1236, %v1237
    %v1239 = vand.u32 %v1238, 4294901760
    %1240 = vmatpush1.msra.mxu0 %v1239
    %v1241 = vand.u32 %v57, 4294901760
    %v1242 = vsub.f32 %v57, %v1241
    %v1243 = vand.u32 %v1242, 4294901760
    %v1244 = vsub.f32 %v1242, %v1243
    %v1245 = vand.u32 %v1244, 4294901760
    %1246 = vmatprep.subr.mxu0 %v1245
    %v1247 = vand.u32 %v56, 4294901760
    %v1248 = vsub.f32 %v56, %v1247
    %v1249 = vand.u32 %v1248, 4294901760
    %v1250 = vsub.f32 %v1248, %v1249
    %v1251 = vand.u32 %v1250, 4294901760
    %1252 = vmatpush1.msra.mxu0 %v1251
    %v1253 = vand.u32 %v53, 4294901760
    %v1254 = vsub.f32 %v53, %v1253
    %v1255 = vand.u32 %v1254, 4294901760
    %v1256 = vsub.f32 %v1254, %v1255
    %v1257 = vand.u32 %v1256, 4294901760
    %1258 = vmatprep.subr.mxu0 %v1257
    %v1259 = vand.u32 %v52, 4294901760
    %v1260 = vsub.f32 %v52, %v1259
    %v1261 = vand.u32 %v1260, 4294901760
    %v1262 = vsub.f32 %v1260, %v1261
    %v1263 = vand.u32 %v1262, 4294901760
    %1264 = vmatpush1.msra.mxu0 %v1263
    %v1265 = vand.u32 %v49, 4294901760
    %v1266 = vsub.f32 %v49, %v1265
    %v1267 = vand.u32 %v1266, 4294901760
    %v1268 = vsub.f32 %v1266, %v1267
    %v1269 = vand.u32 %v1268, 4294901760
    %1270 = vmatprep.subr.mxu0 %v1269
    %v1271 = vand.u32 %v48, 4294901760
    %v1272 = vsub.f32 %v48, %v1271
    %v1273 = vand.u32 %v1272, 4294901760
    %v1274 = vsub.f32 %v1272, %v1273
    %v1275 = vand.u32 %v1274, 4294901760
    %1276 = vmatpush1.msra.mxu0 %v1275
    %v1277 = vand.u32 %v45, 4294901760
    %v1278 = vsub.f32 %v45, %v1277
    %v1279 = vand.u32 %v1278, 4294901760
    %v1280 = vsub.f32 %v1278, %v1279
    %v1281 = vand.u32 %v1280, 4294901760
    %1282 = vmatprep.subr.mxu0 %v1281
    %v1283 = vand.u32 %v44, 4294901760
    %v1284 = vsub.f32 %v44, %v1283
    %v1285 = vand.u32 %v1284, 4294901760
    %v1286 = vsub.f32 %v1284, %v1285
    %v1287 = vand.u32 %v1286, 4294901760
    %1288 = vmatpush1.msra.mxu0 %v1287
    %v1289 = vand.u32 %v41, 4294901760
    %v1290 = vsub.f32 %v41, %v1289
    %v1291 = vand.u32 %v1290, 4294901760
    %v1292 = vsub.f32 %v1290, %v1291
    %v1293 = vand.u32 %v1292, 4294901760
    %1294 = vmatprep.subr.mxu0 %v1293
    %v1295 = vand.u32 %v40, 4294901760
    %v1296 = vsub.f32 %v40, %v1295
    %v1297 = vand.u32 %v1296, 4294901760
    %v1298 = vsub.f32 %v1296, %v1297
    %v1299 = vand.u32 %v1298, 4294901760
    %1300 = vmatpush1.msra.mxu0 %v1299
    %v1301 = vand.u32 %v37, 4294901760
    %v1302 = vsub.f32 %v37, %v1301
    %v1303 = vand.u32 %v1302, 4294901760
    %v1304 = vsub.f32 %v1302, %v1303
    %v1305 = vand.u32 %v1304, 4294901760
    %1306 = vmatprep.subr.mxu0 %v1305
    %v1307 = vand.u32 %v36, 4294901760
    %v1308 = vsub.f32 %v36, %v1307
    %v1309 = vand.u32 %v1308, 4294901760
    %v1310 = vsub.f32 %v1308, %v1309
    %v1311 = vand.u32 %v1310, 4294901760
    %1312 = vmatpush1.msra.mxu0 %v1311
    %1313 = vmatprep.subr.mxu0 0.0
    %1314 = vmatpush2.msra.mxu0 0.0
    %1315 = vmatprep.subr.mxu0 0.0
    %1316 = vmatpush2.msra.mxu0 0.0
    %1317 = vmatprep.subr.mxu0 0.0
    %1318 = vmatpush2.msra.mxu0 0.0
    %1319 = vmatprep.subr.mxu0 0.0
    %1320 = vmatpush2.msra.mxu0 0.0
    %1321 = vmatprep.subr.mxu0 0.0
    %1322 = vmatpush2.msra.mxu0 0.0
    %1323 = vmatprep.subr.mxu0 0.0
    %1324 = vmatpush2.msra.mxu0 0.0
    %1325 = vmatprep.subr.mxu0 0.0
    %1326 = vmatpush2.msra.mxu0 0.0
    %1327 = vmatprep.subr.mxu0 0.0
    %1328 = vmatpush2.msra.mxu0 0.0
    %1329 = vmatprep.subr.mxu0 0.0
    %1330 = vmatpush2.msra.mxu0 0.0
    %1331 = vmatprep.subr.mxu0 0.0
    %1332 = vmatpush2.msra.mxu0 0.0
    %1333 = vmatprep.subr.mxu0 0.0
    %1334 = vmatpush2.msra.mxu0 0.0
    %1335 = vmatprep.subr.mxu0 0.0
    %1336 = vmatpush2.msra.mxu0 0.0
    %1337 = vmatprep.subr.mxu0 0.0
    %1338 = vmatpush2.msra.mxu0 0.0
    %1339 = vmatprep.subr.mxu0 0.0
    %1340 = vmatpush2.msra.mxu0 0.0
    %1341 = vmatprep.subr.mxu0 0.0
    %1342 = vmatpush2.msra.mxu0 0.0
    %1343 = vmatprep.subr.mxu0 0.0
    %1344 = vmatpush2.msra.mxu0 0.0
    %1345 = vmatprep.mubr.f32.mxu0 0.0
    %v1346 = vand.u32 %v28, 4294901760
    %1347 = vmatmul.mubr.f32.gmra.mxu0 %v1346
    %v1348 = vpop.f32.mrf.mxu0
    %v1349 = vadd.f32 %v1106, %v1348
    %v1350 = vpop.f32.mrf.mxu0
    %v1351 = vadd.f32 %v1108, %v1350
    %1352 = vmatprep.mubr.f32.mxu0 0.0
    %v1353 = vand.u32 %v29, 4294901760
    %1354 = vmatmul.mubr.f32.gmra.mxu0 %v1353
    %v1355 = vpop.f32.mrf.mxu0
    %v1356 = vadd.f32 %v1117, %v1355
    %v1357 = vpop.f32.mrf.mxu0
    %v1358 = vadd.f32 %v1119, %v1357
    %1359 = vdwg.mxu0
    %v1360 = vand.u32 %v97, 4294901760
    %v1361 = vsub.f32 %v97, %v1360
    %1362 = vmatprep.subr.mxu0 %v1361
    %v1363 = vand.u32 %v96, 4294901760
    %v1364 = vsub.f32 %v96, %v1363
    %1365 = vmatpush1.msra.mxu0 %v1364
    %v1366 = vand.u32 %v93, 4294901760
    %v1367 = vsub.f32 %v93, %v1366
    %1368 = vmatprep.subr.mxu0 %v1367
    %v1369 = vand.u32 %v92, 4294901760
    %v1370 = vsub.f32 %v92, %v1369
    %1371 = vmatpush1.msra.mxu0 %v1370
    %v1372 = vand.u32 %v89, 4294901760
    %v1373 = vsub.f32 %v89, %v1372
    %1374 = vmatprep.subr.mxu0 %v1373
    %v1375 = vand.u32 %v88, 4294901760
    %v1376 = vsub.f32 %v88, %v1375
    %1377 = vmatpush1.msra.mxu0 %v1376
    %v1378 = vand.u32 %v85, 4294901760
    %v1379 = vsub.f32 %v85, %v1378
    %1380 = vmatprep.subr.mxu0 %v1379
    %v1381 = vand.u32 %v84, 4294901760
    %v1382 = vsub.f32 %v84, %v1381
    %1383 = vmatpush1.msra.mxu0 %v1382
    %v1384 = vand.u32 %v81, 4294901760
    %v1385 = vsub.f32 %v81, %v1384
    %1386 = vmatprep.subr.mxu0 %v1385
    %v1387 = vand.u32 %v80, 4294901760
    %v1388 = vsub.f32 %v80, %v1387
    %1389 = vmatpush1.msra.mxu0 %v1388
    %v1390 = vand.u32 %v77, 4294901760
    %v1391 = vsub.f32 %v77, %v1390
    %1392 = vmatprep.subr.mxu0 %v1391
    %v1393 = vand.u32 %v76, 4294901760
    %v1394 = vsub.f32 %v76, %v1393
    %1395 = vmatpush1.msra.mxu0 %v1394
    %v1396 = vand.u32 %v73, 4294901760
    %v1397 = vsub.f32 %v73, %v1396
    %1398 = vmatprep.subr.mxu0 %v1397
    %v1399 = vand.u32 %v72, 4294901760
    %v1400 = vsub.f32 %v72, %v1399
    %1401 = vmatpush1.msra.mxu0 %v1400
    %v1402 = vand.u32 %v69, 4294901760
    %v1403 = vsub.f32 %v69, %v1402
    %1404 = vmatprep.subr.mxu0 %v1403
    %v1405 = vand.u32 %v68, 4294901760
    %v1406 = vsub.f32 %v68, %v1405
    %1407 = vmatpush1.msra.mxu0 %v1406
    %v1408 = vand.u32 %v65, 4294901760
    %v1409 = vsub.f32 %v65, %v1408
    %1410 = vmatprep.subr.mxu0 %v1409
    %v1411 = vand.u32 %v64, 4294901760
    %v1412 = vsub.f32 %v64, %v1411
    %1413 = vmatpush1.msra.mxu0 %v1412
    %v1414 = vand.u32 %v61, 4294901760
    %v1415 = vsub.f32 %v61, %v1414
    %1416 = vmatprep.subr.mxu0 %v1415
    %v1417 = vand.u32 %v60, 4294901760
    %v1418 = vsub.f32 %v60, %v1417
    %1419 = vmatpush1.msra.mxu0 %v1418
    %v1420 = vand.u32 %v57, 4294901760
    %v1421 = vsub.f32 %v57, %v1420
    %1422 = vmatprep.subr.mxu0 %v1421
    %v1423 = vand.u32 %v56, 4294901760
    %v1424 = vsub.f32 %v56, %v1423
    %1425 = vmatpush1.msra.mxu0 %v1424
    %v1426 = vand.u32 %v53, 4294901760
    %v1427 = vsub.f32 %v53, %v1426
    %1428 = vmatprep.subr.mxu0 %v1427
    %v1429 = vand.u32 %v52, 4294901760
    %v1430 = vsub.f32 %v52, %v1429
    %1431 = vmatpush1.msra.mxu0 %v1430
    %v1432 = vand.u32 %v49, 4294901760
    %v1433 = vsub.f32 %v49, %v1432
    %1434 = vmatprep.subr.mxu0 %v1433
    %v1435 = vand.u32 %v48, 4294901760
    %v1436 = vsub.f32 %v48, %v1435
    %1437 = vmatpush1.msra.mxu0 %v1436
    %v1438 = vand.u32 %v45, 4294901760
    %v1439 = vsub.f32 %v45, %v1438
    %1440 = vmatprep.subr.mxu0 %v1439
    %v1441 = vand.u32 %v44, 4294901760
    %v1442 = vsub.f32 %v44, %v1441
    %1443 = vmatpush1.msra.mxu0 %v1442
    %v1444 = vand.u32 %v41, 4294901760
    %v1445 = vsub.f32 %v41, %v1444
    %1446 = vmatprep.subr.mxu0 %v1445
    %v1447 = vand.u32 %v40, 4294901760
    %v1448 = vsub.f32 %v40, %v1447
    %1449 = vmatpush1.msra.mxu0 %v1448
    %v1450 = vand.u32 %v37, 4294901760
    %v1451 = vsub.f32 %v37, %v1450
    %1452 = vmatprep.subr.mxu0 %v1451
    %v1453 = vand.u32 %v36, 4294901760
    %v1454 = vsub.f32 %v36, %v1453
    %1455 = vmatpush1.msra.mxu0 %v1454
    %1456 = vmatprep.subr.mxu0 0.0
    %1457 = vmatpush2.msra.mxu0 0.0
    %1458 = vmatprep.subr.mxu0 0.0
    %1459 = vmatpush2.msra.mxu0 0.0
    %1460 = vmatprep.subr.mxu0 0.0
    %1461 = vmatpush2.msra.mxu0 0.0
    %1462 = vmatprep.subr.mxu0 0.0
    %1463 = vmatpush2.msra.mxu0 0.0
    %1464 = vmatprep.subr.mxu0 0.0
    %1465 = vmatpush2.msra.mxu0 0.0
    %1466 = vmatprep.subr.mxu0 0.0
    %1467 = vmatpush2.msra.mxu0 0.0
    %1468 = vmatprep.subr.mxu0 0.0
    %1469 = vmatpush2.msra.mxu0 0.0
    %1470 = vmatprep.subr.mxu0 0.0
    %1471 = vmatpush2.msra.mxu0 0.0
    %1472 = vmatprep.subr.mxu0 0.0
    %1473 = vmatpush2.msra.mxu0 0.0
    %1474 = vmatprep.subr.mxu0 0.0
    %1475 = vmatpush2.msra.mxu0 0.0
    %1476 = vmatprep.subr.mxu0 0.0
    %1477 = vmatpush2.msra.mxu0 0.0
    %1478 = vmatprep.subr.mxu0 0.0
    %1479 = vmatpush2.msra.mxu0 0.0
    %1480 = vmatprep.subr.mxu0 0.0
    %1481 = vmatpush2.msra.mxu0 0.0
    %1482 = vmatprep.subr.mxu0 0.0
    %1483 = vmatpush2.msra.mxu0 0.0
    %1484 = vmatprep.subr.mxu0 0.0
    %1485 = vmatpush2.msra.mxu0 0.0
    %1486 = vmatprep.subr.mxu0 0.0
    %1487 = vmatpush2.msra.mxu0 0.0
    %1488 = vmatprep.mubr.f32.mxu0 0.0
    %v1489 = vand.u32 %v28, 4294901760
    %v1490 = vsub.f32 %v28, %v1489
    %1491 = vmatmul.mubr.f32.gmra.mxu0 %v1490
    %v1492 = vpop.f32.mrf.mxu0
    %v1493 = vadd.f32 %v1349, %v1492
    %v1494 = vpop.f32.mrf.mxu0
    %v1495 = vadd.f32 %v1351, %v1494
    %1496 = vmatprep.mubr.f32.mxu0 0.0
    %v1497 = vand.u32 %v29, 4294901760
    %v1498 = vsub.f32 %v29, %v1497
    %1499 = vmatmul.mubr.f32.gmra.mxu0 %v1498
    %v1500 = vpop.f32.mrf.mxu0
    %v1501 = vadd.f32 %v1356, %v1500
    %v1502 = vpop.f32.mrf.mxu0
    %v1503 = vadd.f32 %v1358, %v1502
    %1504 = vdwg.mxu0
    %v1505 = vand.u32 %v97, 4294901760
    %1506 = vmatprep.subr.mxu0 %v1505
    %v1507 = vand.u32 %v96, 4294901760
    %1508 = vmatpush1.msra.mxu0 %v1507
    %v1509 = vand.u32 %v93, 4294901760
    %1510 = vmatprep.subr.mxu0 %v1509
    %v1511 = vand.u32 %v92, 4294901760
    %1512 = vmatpush1.msra.mxu0 %v1511
    %v1513 = vand.u32 %v89, 4294901760
    %1514 = vmatprep.subr.mxu0 %v1513
    %v1515 = vand.u32 %v88, 4294901760
    %1516 = vmatpush1.msra.mxu0 %v1515
    %v1517 = vand.u32 %v85, 4294901760
    %1518 = vmatprep.subr.mxu0 %v1517
    %v1519 = vand.u32 %v84, 4294901760
    %1520 = vmatpush1.msra.mxu0 %v1519
    %v1521 = vand.u32 %v81, 4294901760
    %1522 = vmatprep.subr.mxu0 %v1521
    %v1523 = vand.u32 %v80, 4294901760
    %1524 = vmatpush1.msra.mxu0 %v1523
    %v1525 = vand.u32 %v77, 4294901760
    %1526 = vmatprep.subr.mxu0 %v1525
    %v1527 = vand.u32 %v76, 4294901760
    %1528 = vmatpush1.msra.mxu0 %v1527
    %v1529 = vand.u32 %v73, 4294901760
    %1530 = vmatprep.subr.mxu0 %v1529
    %v1531 = vand.u32 %v72, 4294901760
    %1532 = vmatpush1.msra.mxu0 %v1531
    %v1533 = vand.u32 %v69, 4294901760
    %1534 = vmatprep.subr.mxu0 %v1533
    %v1535 = vand.u32 %v68, 4294901760
    %1536 = vmatpush1.msra.mxu0 %v1535
    %v1537 = vand.u32 %v65, 4294901760
    %1538 = vmatprep.subr.mxu0 %v1537
    %v1539 = vand.u32 %v64, 4294901760
    %1540 = vmatpush1.msra.mxu0 %v1539
    %v1541 = vand.u32 %v61, 4294901760
    %1542 = vmatprep.subr.mxu0 %v1541
    %v1543 = vand.u32 %v60, 4294901760
    %1544 = vmatpush1.msra.mxu0 %v1543
    %v1545 = vand.u32 %v57, 4294901760
    %1546 = vmatprep.subr.mxu0 %v1545
    %v1547 = vand.u32 %v56, 4294901760
    %1548 = vmatpush1.msra.mxu0 %v1547
    %v1549 = vand.u32 %v53, 4294901760
    %1550 = vmatprep.subr.mxu0 %v1549
    %v1551 = vand.u32 %v52, 4294901760
    %1552 = vmatpush1.msra.mxu0 %v1551
    %v1553 = vand.u32 %v49, 4294901760
    %1554 = vmatprep.subr.mxu0 %v1553
    %v1555 = vand.u32 %v48, 4294901760
    %1556 = vmatpush1.msra.mxu0 %v1555
    %v1557 = vand.u32 %v45, 4294901760
    %1558 = vmatprep.subr.mxu0 %v1557
    %v1559 = vand.u32 %v44, 4294901760
    %1560 = vmatpush1.msra.mxu0 %v1559
    %v1561 = vand.u32 %v41, 4294901760
    %1562 = vmatprep.subr.mxu0 %v1561
    %v1563 = vand.u32 %v40, 4294901760
    %1564 = vmatpush1.msra.mxu0 %v1563
    %v1565 = vand.u32 %v37, 4294901760
    %1566 = vmatprep.subr.mxu0 %v1565
    %v1567 = vand.u32 %v36, 4294901760
    %1568 = vmatpush1.msra.mxu0 %v1567
    %1569 = vmatprep.subr.mxu0 0.0
    %1570 = vmatpush2.msra.mxu0 0.0
    %1571 = vmatprep.subr.mxu0 0.0
    %1572 = vmatpush2.msra.mxu0 0.0
    %1573 = vmatprep.subr.mxu0 0.0
    %1574 = vmatpush2.msra.mxu0 0.0
    %1575 = vmatprep.subr.mxu0 0.0
    %1576 = vmatpush2.msra.mxu0 0.0
    %1577 = vmatprep.subr.mxu0 0.0
    %1578 = vmatpush2.msra.mxu0 0.0
    %1579 = vmatprep.subr.mxu0 0.0
    %1580 = vmatpush2.msra.mxu0 0.0
    %1581 = vmatprep.subr.mxu0 0.0
    %1582 = vmatpush2.msra.mxu0 0.0
    %1583 = vmatprep.subr.mxu0 0.0
    %1584 = vmatpush2.msra.mxu0 0.0
    %1585 = vmatprep.subr.mxu0 0.0
    %1586 = vmatpush2.msra.mxu0 0.0
    %1587 = vmatprep.subr.mxu0 0.0
    %1588 = vmatpush2.msra.mxu0 0.0
    %1589 = vmatprep.subr.mxu0 0.0
    %1590 = vmatpush2.msra.mxu0 0.0
    %1591 = vmatprep.subr.mxu0 0.0
    %1592 = vmatpush2.msra.mxu0 0.0
    %1593 = vmatprep.subr.mxu0 0.0
    %1594 = vmatpush2.msra.mxu0 0.0
    %1595 = vmatprep.subr.mxu0 0.0
    %1596 = vmatpush2.msra.mxu0 0.0
    %1597 = vmatprep.subr.mxu0 0.0
    %1598 = vmatpush2.msra.mxu0 0.0
    %1599 = vmatprep.subr.mxu0 0.0
    %1600 = vmatpush2.msra.mxu0 0.0
    %1601 = vmatprep.mubr.f32.mxu0 0.0
    %v1602 = vand.u32 %v28, 4294901760
    %v1603 = vsub.f32 %v28, %v1602
    %v1604 = vand.u32 %v1603, 4294901760
    %1605 = vmatmul.mubr.f32.gmra.mxu0 %v1604
    %v1606 = vpop.f32.mrf.mxu0
    %v1607 = vadd.f32 %v1493, %v1606
    %v1608 = vpop.f32.mrf.mxu0
    %v1609 = vadd.f32 %v1495, %v1608
    %1610 = vmatprep.mubr.f32.mxu0 0.0
    %v1611 = vand.u32 %v29, 4294901760
    %v1612 = vsub.f32 %v29, %v1611
    %v1613 = vand.u32 %v1612, 4294901760
    %1614 = vmatmul.mubr.f32.gmra.mxu0 %v1613
    %v1615 = vpop.f32.mrf.mxu0
    %v1616 = vadd.f32 %v1501, %v1615
    %v1617 = vpop.f32.mrf.mxu0
    %v1618 = vadd.f32 %v1503, %v1617
    %1619 = vdwg.mxu0
    %v1620 = vand.u32 %v97, 4294901760
    %v1621 = vsub.f32 %v97, %v1620
    %v1622 = vand.u32 %v1621, 4294901760
    %1623 = vmatprep.subr.mxu0 %v1622
    %v1624 = vand.u32 %v96, 4294901760
    %v1625 = vsub.f32 %v96, %v1624
    %v1626 = vand.u32 %v1625, 4294901760
    %1627 = vmatpush1.msra.mxu0 %v1626
    %v1628 = vand.u32 %v93, 4294901760
    %v1629 = vsub.f32 %v93, %v1628
    %v1630 = vand.u32 %v1629, 4294901760
    %1631 = vmatprep.subr.mxu0 %v1630
    %v1632 = vand.u32 %v92, 4294901760
    %v1633 = vsub.f32 %v92, %v1632
    %v1634 = vand.u32 %v1633, 4294901760
    %1635 = vmatpush1.msra.mxu0 %v1634
    %v1636 = vand.u32 %v89, 4294901760
    %v1637 = vsub.f32 %v89, %v1636
    %v1638 = vand.u32 %v1637, 4294901760
    %1639 = vmatprep.subr.mxu0 %v1638
    %v1640 = vand.u32 %v88, 4294901760
    %v1641 = vsub.f32 %v88, %v1640
    %v1642 = vand.u32 %v1641, 4294901760
    %1643 = vmatpush1.msra.mxu0 %v1642
    %v1644 = vand.u32 %v85, 4294901760
    %v1645 = vsub.f32 %v85, %v1644
    %v1646 = vand.u32 %v1645, 4294901760
    %1647 = vmatprep.subr.mxu0 %v1646
    %v1648 = vand.u32 %v84, 4294901760
    %v1649 = vsub.f32 %v84, %v1648
    %v1650 = vand.u32 %v1649, 4294901760
    %1651 = vmatpush1.msra.mxu0 %v1650
    %v1652 = vand.u32 %v81, 4294901760
    %v1653 = vsub.f32 %v81, %v1652
    %v1654 = vand.u32 %v1653, 4294901760
    %1655 = vmatprep.subr.mxu0 %v1654
    %v1656 = vand.u32 %v80, 4294901760
    %v1657 = vsub.f32 %v80, %v1656
    %v1658 = vand.u32 %v1657, 4294901760
    %1659 = vmatpush1.msra.mxu0 %v1658
    %v1660 = vand.u32 %v77, 4294901760
    %v1661 = vsub.f32 %v77, %v1660
    %v1662 = vand.u32 %v1661, 4294901760
    %1663 = vmatprep.subr.mxu0 %v1662
    %v1664 = vand.u32 %v76, 4294901760
    %v1665 = vsub.f32 %v76, %v1664
    %v1666 = vand.u32 %v1665, 4294901760
    %1667 = vmatpush1.msra.mxu0 %v1666
    %v1668 = vand.u32 %v73, 4294901760
    %v1669 = vsub.f32 %v73, %v1668
    %v1670 = vand.u32 %v1669, 4294901760
    %1671 = vmatprep.subr.mxu0 %v1670
    %v1672 = vand.u32 %v72, 4294901760
    %v1673 = vsub.f32 %v72, %v1672
    %v1674 = vand.u32 %v1673, 4294901760
    %1675 = vmatpush1.msra.mxu0 %v1674
    %v1676 = vand.u32 %v69, 4294901760
    %v1677 = vsub.f32 %v69, %v1676
    %v1678 = vand.u32 %v1677, 4294901760
    %1679 = vmatprep.subr.mxu0 %v1678
    %v1680 = vand.u32 %v68, 4294901760
    %v1681 = vsub.f32 %v68, %v1680
    %v1682 = vand.u32 %v1681, 4294901760
    %1683 = vmatpush1.msra.mxu0 %v1682
    %v1684 = vand.u32 %v65, 4294901760
    %v1685 = vsub.f32 %v65, %v1684
    %v1686 = vand.u32 %v1685, 4294901760
    %1687 = vmatprep.subr.mxu0 %v1686
    %v1688 = vand.u32 %v64, 4294901760
    %v1689 = vsub.f32 %v64, %v1688
    %v1690 = vand.u32 %v1689, 4294901760
    %1691 = vmatpush1.msra.mxu0 %v1690
    %v1692 = vand.u32 %v61, 4294901760
    %v1693 = vsub.f32 %v61, %v1692
    %v1694 = vand.u32 %v1693, 4294901760
    %1695 = vmatprep.subr.mxu0 %v1694
    %v1696 = vand.u32 %v60, 4294901760
    %v1697 = vsub.f32 %v60, %v1696
    %v1698 = vand.u32 %v1697, 4294901760
    %1699 = vmatpush1.msra.mxu0 %v1698
    %v1700 = vand.u32 %v57, 4294901760
    %v1701 = vsub.f32 %v57, %v1700
    %v1702 = vand.u32 %v1701, 4294901760
    %1703 = vmatprep.subr.mxu0 %v1702
    %v1704 = vand.u32 %v56, 4294901760
    %v1705 = vsub.f32 %v56, %v1704
    %v1706 = vand.u32 %v1705, 4294901760
    %1707 = vmatpush1.msra.mxu0 %v1706
    %v1708 = vand.u32 %v53, 4294901760
    %v1709 = vsub.f32 %v53, %v1708
    %v1710 = vand.u32 %v1709, 4294901760
    %1711 = vmatprep.subr.mxu0 %v1710
    %v1712 = vand.u32 %v52, 4294901760
    %v1713 = vsub.f32 %v52, %v1712
    %v1714 = vand.u32 %v1713, 4294901760
    %1715 = vmatpush1.msra.mxu0 %v1714
    %v1716 = vand.u32 %v49, 4294901760
    %v1717 = vsub.f32 %v49, %v1716
    %v1718 = vand.u32 %v1717, 4294901760
    %1719 = vmatprep.subr.mxu0 %v1718
    %v1720 = vand.u32 %v48, 4294901760
    %v1721 = vsub.f32 %v48, %v1720
    %v1722 = vand.u32 %v1721, 4294901760
    %1723 = vmatpush1.msra.mxu0 %v1722
    %v1724 = vand.u32 %v45, 4294901760
    %v1725 = vsub.f32 %v45, %v1724
    %v1726 = vand.u32 %v1725, 4294901760
    %1727 = vmatprep.subr.mxu0 %v1726
    %v1728 = vand.u32 %v44, 4294901760
    %v1729 = vsub.f32 %v44, %v1728
    %v1730 = vand.u32 %v1729, 4294901760
    %1731 = vmatpush1.msra.mxu0 %v1730
    %v1732 = vand.u32 %v41, 4294901760
    %v1733 = vsub.f32 %v41, %v1732
    %v1734 = vand.u32 %v1733, 4294901760
    %1735 = vmatprep.subr.mxu0 %v1734
    %v1736 = vand.u32 %v40, 4294901760
    %v1737 = vsub.f32 %v40, %v1736
    %v1738 = vand.u32 %v1737, 4294901760
    %1739 = vmatpush1.msra.mxu0 %v1738
    %v1740 = vand.u32 %v37, 4294901760
    %v1741 = vsub.f32 %v37, %v1740
    %v1742 = vand.u32 %v1741, 4294901760
    %1743 = vmatprep.subr.mxu0 %v1742
    %v1744 = vand.u32 %v36, 4294901760
    %v1745 = vsub.f32 %v36, %v1744
    %v1746 = vand.u32 %v1745, 4294901760
    %1747 = vmatpush1.msra.mxu0 %v1746
    %1748 = vmatprep.subr.mxu0 0.0
    %1749 = vmatpush2.msra.mxu0 0.0
    %1750 = vmatprep.subr.mxu0 0.0
    %1751 = vmatpush2.msra.mxu0 0.0
    %1752 = vmatprep.subr.mxu0 0.0
    %1753 = vmatpush2.msra.mxu0 0.0
    %1754 = vmatprep.subr.mxu0 0.0
    %1755 = vmatpush2.msra.mxu0 0.0
    %1756 = vmatprep.subr.mxu0 0.0
    %1757 = vmatpush2.msra.mxu0 0.0
    %1758 = vmatprep.subr.mxu0 0.0
    %1759 = vmatpush2.msra.mxu0 0.0
    %1760 = vmatprep.subr.mxu0 0.0
    %1761 = vmatpush2.msra.mxu0 0.0
    %1762 = vmatprep.subr.mxu0 0.0
    %1763 = vmatpush2.msra.mxu0 0.0
    %1764 = vmatprep.subr.mxu0 0.0
    %1765 = vmatpush2.msra.mxu0 0.0
    %1766 = vmatprep.subr.mxu0 0.0
    %1767 = vmatpush2.msra.mxu0 0.0
    %1768 = vmatprep.subr.mxu0 0.0
    %1769 = vmatpush2.msra.mxu0 0.0
    %1770 = vmatprep.subr.mxu0 0.0
    %1771 = vmatpush2.msra.mxu0 0.0
    %1772 = vmatprep.subr.mxu0 0.0
    %1773 = vmatpush2.msra.mxu0 0.0
    %1774 = vmatprep.subr.mxu0 0.0
    %1775 = vmatpush2.msra.mxu0 0.0
    %1776 = vmatprep.subr.mxu0 0.0
    %1777 = vmatpush2.msra.mxu0 0.0
    %1778 = vmatprep.subr.mxu0 0.0
    %1779 = vmatpush2.msra.mxu0 0.0
    %1780 = vmatprep.mubr.f32.mxu0 0.0
    %v1781 = vand.u32 %v28, 4294901760
    %1782 = vmatmul.mubr.f32.gmra.mxu0 %v1781
    %v1783 = vpop.f32.mrf.mxu0
    %v1784 = vadd.f32 %v1607, %v1783
    %v1785 = vpop.f32.mrf.mxu0
    %v1786 = vadd.f32 %v1609, %v1785
    %1787 = vmatprep.mubr.f32.mxu0 0.0
    %v1788 = vand.u32 %v29, 4294901760
    %1789 = vmatmul.mubr.f32.gmra.mxu0 %v1788
    %v1790 = vpop.f32.mrf.mxu0
    %v1791 = vadd.f32 %v1616, %v1790
    %v1792 = vpop.f32.mrf.mxu0
    %v1793 = vadd.f32 %v1618, %v1792
    %1794 = vdwg.mxu0
    %v1795 = vand.u32 %v97, 4294901760
    %1796 = vmatprep.subr.mxu0 %v1795
    %v1797 = vand.u32 %v96, 4294901760
    %1798 = vmatpush1.msra.mxu0 %v1797
    %v1799 = vand.u32 %v93, 4294901760
    %1800 = vmatprep.subr.mxu0 %v1799
    %v1801 = vand.u32 %v92, 4294901760
    %1802 = vmatpush1.msra.mxu0 %v1801
    %v1803 = vand.u32 %v89, 4294901760
    %1804 = vmatprep.subr.mxu0 %v1803
    %v1805 = vand.u32 %v88, 4294901760
    %1806 = vmatpush1.msra.mxu0 %v1805
    %v1807 = vand.u32 %v85, 4294901760
    %1808 = vmatprep.subr.mxu0 %v1807
    %v1809 = vand.u32 %v84, 4294901760
    %1810 = vmatpush1.msra.mxu0 %v1809
    %v1811 = vand.u32 %v81, 4294901760
    %1812 = vmatprep.subr.mxu0 %v1811
    %v1813 = vand.u32 %v80, 4294901760
    %1814 = vmatpush1.msra.mxu0 %v1813
    %v1815 = vand.u32 %v77, 4294901760
    %1816 = vmatprep.subr.mxu0 %v1815
    %v1817 = vand.u32 %v76, 4294901760
    %1818 = vmatpush1.msra.mxu0 %v1817
    %v1819 = vand.u32 %v73, 4294901760
    %1820 = vmatprep.subr.mxu0 %v1819
    %v1821 = vand.u32 %v72, 4294901760
    %1822 = vmatpush1.msra.mxu0 %v1821
    %v1823 = vand.u32 %v69, 4294901760
    %1824 = vmatprep.subr.mxu0 %v1823
    %v1825 = vand.u32 %v68, 4294901760
    %1826 = vmatpush1.msra.mxu0 %v1825
    %v1827 = vand.u32 %v65, 4294901760
    %1828 = vmatprep.subr.mxu0 %v1827
    %v1829 = vand.u32 %v64, 4294901760
    %1830 = vmatpush1.msra.mxu0 %v1829
    %v1831 = vand.u32 %v61, 4294901760
    %1832 = vmatprep.subr.mxu0 %v1831
    %v1833 = vand.u32 %v60, 4294901760
    %1834 = vmatpush1.msra.mxu0 %v1833
    %v1835 = vand.u32 %v57, 4294901760
    %1836 = vmatprep.subr.mxu0 %v1835
    %v1837 = vand.u32 %v56, 4294901760
    %1838 = vmatpush1.msra.mxu0 %v1837
    %v1839 = vand.u32 %v53, 4294901760
    %1840 = vmatprep.subr.mxu0 %v1839
    %v1841 = vand.u32 %v52, 4294901760
    %1842 = vmatpush1.msra.mxu0 %v1841
    %v1843 = vand.u32 %v49, 4294901760
    %1844 = vmatprep.subr.mxu0 %v1843
    %v1845 = vand.u32 %v48, 4294901760
    %1846 = vmatpush1.msra.mxu0 %v1845
    %v1847 = vand.u32 %v45, 4294901760
    %1848 = vmatprep.subr.mxu0 %v1847
    %v1849 = vand.u32 %v44, 4294901760
    %1850 = vmatpush1.msra.mxu0 %v1849
    %v1851 = vand.u32 %v41, 4294901760
    %1852 = vmatprep.subr.mxu0 %v1851
    %v1853 = vand.u32 %v40, 4294901760
    %1854 = vmatpush1.msra.mxu0 %v1853
    %v1855 = vand.u32 %v37, 4294901760
    %1856 = vmatprep.subr.mxu0 %v1855
    %v1857 = vand.u32 %v36, 4294901760
    %1858 = vmatpush1.msra.mxu0 %v1857
    %1859 = vmatprep.subr.mxu0 0.0
    %1860 = vmatpush2.msra.mxu0 0.0
    %1861 = vmatprep.subr.mxu0 0.0
    %1862 = vmatpush2.msra.mxu0 0.0
    %1863 = vmatprep.subr.mxu0 0.0
    %1864 = vmatpush2.msra.mxu0 0.0
    %1865 = vmatprep.subr.mxu0 0.0
    %1866 = vmatpush2.msra.mxu0 0.0
    %1867 = vmatprep.subr.mxu0 0.0
    %1868 = vmatpush2.msra.mxu0 0.0
    %1869 = vmatprep.subr.mxu0 0.0
    %1870 = vmatpush2.msra.mxu0 0.0
    %1871 = vmatprep.subr.mxu0 0.0
    %1872 = vmatpush2.msra.mxu0 0.0
    %1873 = vmatprep.subr.mxu0 0.0
    %1874 = vmatpush2.msra.mxu0 0.0
    %1875 = vmatprep.subr.mxu0 0.0
    %1876 = vmatpush2.msra.mxu0 0.0
    %1877 = vmatprep.subr.mxu0 0.0
    %1878 = vmatpush2.msra.mxu0 0.0
    %1879 = vmatprep.subr.mxu0 0.0
    %1880 = vmatpush2.msra.mxu0 0.0
    %1881 = vmatprep.subr.mxu0 0.0
    %1882 = vmatpush2.msra.mxu0 0.0
    %1883 = vmatprep.subr.mxu0 0.0
    %1884 = vmatpush2.msra.mxu0 0.0
    %1885 = vmatprep.subr.mxu0 0.0
    %1886 = vmatpush2.msra.mxu0 0.0
    %1887 = vmatprep.subr.mxu0 0.0
    %1888 = vmatpush2.msra.mxu0 0.0
    %1889 = vmatprep.subr.mxu0 0.0
    %1890 = vmatpush2.msra.mxu0 0.0
    %1891 = vmatprep.mubr.f32.mxu0 0.0
    %v1892 = vand.u32 %v28, 4294901760
    %1893 = vmatmul.mubr.f32.gmra.mxu0 %v1892
    %v1894 = vpop.f32.mrf.mxu0
    %v1895 = vadd.f32 %v1784, %v1894
    %v1896 = vpop.f32.mrf.mxu0
    %v1897 = vadd.f32 %v1786, %v1896
    %1898 = vmatprep.mubr.f32.mxu0 0.0
    %v1899 = vand.u32 %v29, 4294901760
    %1900 = vmatmul.mubr.f32.gmra.mxu0 %v1899
    %v1901 = vpop.f32.mrf.mxu0
    %v1902 = vadd.f32 %v1791, %v1901
    %v1903 = vpop.f32.mrf.mxu0
    %v1904 = vadd.f32 %v1793, %v1903
    %1905 = vdwg.mxu0
    %v1906 = vmul.f32 %v34, %v34
    %v1907 = vmul.f32 %v35, %v35
    %v1908 = vmul.f32 %v36, %v36
    %v1909 = vmul.f32 %v37, %v37
    %v1910 = vmul.f32 %v38, %v38
    %v1911 = vmul.f32 %v39, %v39
    %v1912 = vmul.f32 %v40, %v40
    %v1913 = vmul.f32 %v41, %v41
    %v1914 = vmul.f32 %v42, %v42
    %v1915 = vmul.f32 %v43, %v43
    %v1916 = vmul.f32 %v44, %v44
    %v1917 = vmul.f32 %v45, %v45
    %v1918 = vmul.f32 %v46, %v46
    %v1919 = vmul.f32 %v47, %v47
    %v1920 = vmul.f32 %v48, %v48
    %v1921 = vmul.f32 %v49, %v49
    %v1922 = vmul.f32 %v50, %v50
    %v1923 = vmul.f32 %v51, %v51
    %v1924 = vmul.f32 %v52, %v52
    %v1925 = vmul.f32 %v53, %v53
    %v1926 = vmul.f32 %v54, %v54
    %v1927 = vmul.f32 %v55, %v55
    %v1928 = vmul.f32 %v56, %v56
    %v1929 = vmul.f32 %v57, %v57
    %v1930 = vmul.f32 %v58, %v58
    %v1931 = vmul.f32 %v59, %v59
    %v1932 = vmul.f32 %v60, %v60
    %v1933 = vmul.f32 %v61, %v61
    %v1934 = vmul.f32 %v62, %v62
    %v1935 = vmul.f32 %v63, %v63
    %v1936 = vmul.f32 %v64, %v64
    %v1937 = vmul.f32 %v65, %v65
    %v1938 = vmul.f32 %v66, %v66
    %v1939 = vmul.f32 %v67, %v67
    %v1940 = vmul.f32 %v68, %v68
    %v1941 = vmul.f32 %v69, %v69
    %v1942 = vmul.f32 %v70, %v70
    %v1943 = vmul.f32 %v71, %v71
    %v1944 = vmul.f32 %v72, %v72
    %v1945 = vmul.f32 %v73, %v73
    %v1946 = vmul.f32 %v74, %v74
    %v1947 = vmul.f32 %v75, %v75
    %v1948 = vmul.f32 %v76, %v76
    %v1949 = vmul.f32 %v77, %v77
    %v1950 = vmul.f32 %v78, %v78
    %v1951 = vmul.f32 %v79, %v79
    %v1952 = vmul.f32 %v80, %v80
    %v1953 = vmul.f32 %v81, %v81
    %v1954 = vmul.f32 %v82, %v82
    %v1955 = vmul.f32 %v83, %v83
    %v1956 = vmul.f32 %v84, %v84
    %v1957 = vmul.f32 %v85, %v85
    %v1958 = vmul.f32 %v86, %v86
    %v1959 = vmul.f32 %v87, %v87
    %v1960 = vmul.f32 %v88, %v88
    %v1961 = vmul.f32 %v89, %v89
    %v1962 = vmul.f32 %v90, %v90
    %v1963 = vmul.f32 %v91, %v91
    %v1964 = vmul.f32 %v92, %v92
    %v1965 = vmul.f32 %v93, %v93
    %v1966 = vmul.f32 %v94, %v94
    %v1967 = vmul.f32 %v95, %v95
    %v1968 = vmul.f32 %v96, %v96
    %v1969 = vmul.f32 %v97, %v97
    %v1970 = vadd.f32 %v1906, %v1910
    %v1971 = vadd.f32 %v1970, %v1914
    %v1972 = vadd.f32 %v1971, %v1918
    %v1973 = vadd.f32 %v1972, %v1922
    %v1974 = vadd.f32 %v1973, %v1926
    %v1975 = vadd.f32 %v1974, %v1930
    %v1976 = vadd.f32 %v1975, %v1934
    %v1977 = vadd.f32 %v1976, %v1938
    %v1978 = vadd.f32 %v1977, %v1942
    %v1979 = vadd.f32 %v1978, %v1946
    %v1980 = vadd.f32 %v1979, %v1950
    %v1981 = vadd.f32 %v1980, %v1954
    %v1982 = vadd.f32 %v1981, %v1958
    %v1983 = vadd.f32 %v1982, %v1962
    %v1984 = vadd.f32 %v1983, %v1966
    %v1985 = vrot.slane %v1984, 4
    %v1986 = vadd.f32 %v1984, %v1985
    %v1987 = vrot.slane %v1986, 2
    %v1988 = vadd.f32 %v1986, %v1987
    %v1989 = vrot.slane %v1988, 1
    %v1990 = vadd.f32 %v1988, %v1989
    %v1991 = vadd.f32 %v1907, %v1911
    %v1992 = vadd.f32 %v1991, %v1915
    %v1993 = vadd.f32 %v1992, %v1919
    %v1994 = vadd.f32 %v1993, %v1923
    %v1995 = vadd.f32 %v1994, %v1927
    %v1996 = vadd.f32 %v1995, %v1931
    %v1997 = vadd.f32 %v1996, %v1935
    %v1998 = vadd.f32 %v1997, %v1939
    %v1999 = vadd.f32 %v1998, %v1943
    %v2000 = vadd.f32 %v1999, %v1947
    %v2001 = vadd.f32 %v2000, %v1951
    %v2002 = vadd.f32 %v2001, %v1955
    %v2003 = vadd.f32 %v2002, %v1959
    %v2004 = vadd.f32 %v2003, %v1963
    %v2005 = vadd.f32 %v2004, %v1967
    %v2006 = vrot.slane %v2005, 4
    %v2007 = vadd.f32 %v2005, %v2006
    %v2008 = vrot.slane %v2007, 2
    %v2009 = vadd.f32 %v2007, %v2008
    %v2010 = vrot.slane %v2009, 1
    %v2011 = vadd.f32 %v2009, %v2010
    %v2012 = vadd.f32 %v1908, %v1912
    %v2013 = vadd.f32 %v2012, %v1916
    %v2014 = vadd.f32 %v2013, %v1920
    %v2015 = vadd.f32 %v2014, %v1924
    %v2016 = vadd.f32 %v2015, %v1928
    %v2017 = vadd.f32 %v2016, %v1932
    %v2018 = vadd.f32 %v2017, %v1936
    %v2019 = vadd.f32 %v2018, %v1940
    %v2020 = vadd.f32 %v2019, %v1944
    %v2021 = vadd.f32 %v2020, %v1948
    %v2022 = vadd.f32 %v2021, %v1952
    %v2023 = vadd.f32 %v2022, %v1956
    %v2024 = vadd.f32 %v2023, %v1960
    %v2025 = vadd.f32 %v2024, %v1964
    %v2026 = vadd.f32 %v2025, %v1968
    %v2027 = vrot.slane %v2026, 4
    %v2028 = vadd.f32 %v2026, %v2027
    %v2029 = vrot.slane %v2028, 2
    %v2030 = vadd.f32 %v2028, %v2029
    %v2031 = vrot.slane %v2030, 1
    %v2032 = vadd.f32 %v2030, %v2031
    %v2033 = vadd.f32 %v1909, %v1913
    %v2034 = vadd.f32 %v2033, %v1917
    %v2035 = vadd.f32 %v2034, %v1921
    %v2036 = vadd.f32 %v2035, %v1925
    %v2037 = vadd.f32 %v2036, %v1929
    %v2038 = vadd.f32 %v2037, %v1933
    %v2039 = vadd.f32 %v2038, %v1937
    %v2040 = vadd.f32 %v2039, %v1941
    %v2041 = vadd.f32 %v2040, %v1945
    %v2042 = vadd.f32 %v2041, %v1949
    %v2043 = vadd.f32 %v2042, %v1953
    %v2044 = vadd.f32 %v2043, %v1957
    %v2045 = vadd.f32 %v2044, %v1961
    %v2046 = vadd.f32 %v2045, %v1965
    %v2047 = vadd.f32 %v2046, %v1969
    %v2048 = vrot.slane %v2047, 4
    %v2049 = vadd.f32 %v2047, %v2048
    %v2050 = vrot.slane %v2049, 2
    %v2051 = vadd.f32 %v2049, %v2050
    %v2052 = vrot.slane %v2051, 1
    %v2053 = vadd.f32 %v2051, %v2052
    %v2054 = vmax.f32 %v1990, 1e-30
    %v2055 = vmax.f32 %v2011, 1e-30
    %v2056 = vmax.f32 %v2032, 1e-30
    %v2057 = vmax.f32 %v2053, 1e-30
    %v2058 = vrsqrt.pop %v2054
    %v2059 = vrsqrt.pop %v2055
    %v2060 = vrsqrt.pop %v2056
    %v2061 = vrsqrt.pop %v2057
    %v2062 = vlaneseq
    %v2063 = vand.u32 %v2062, 127
    %v2064 = vadd.s32 %v2063, 128
    %v2065 = vadd.s32 %v2063, 256
    %v2066 = vadd.s32 %v2063, 384
    %s2067 = smul.u32 0, 512
    %v2068 = vstv %s2067
    %v2069 = vadd.s32 %v2068, %v2063
    %v2070 = vadd.s32 %v2068, %v2064
    %v2071 = vadd.s32 %v2068, %v2065
    %v2072 = vadd.s32 %v2068, %v2066
    %vm2073 = vcmp.lt.s32.totalorder %v2069, 400
    %vm2074 = vcmp.lt.s32.totalorder %v2070, 400
    %vm2075 = vcmp.lt.s32.totalorder %v2071, 400
    %vm2076 = vcmp.lt.s32.totalorder %v2072, 400
    %v2077 = vlaneseq
    %v2078 = vshrl.u32 %v2077, 7
    %v2079 = vadd.s32 %v2078, 8
    %v2080 = vmul.u32 %v2078, 40
    %v2081 = vmul.u32 %v2079, 40
    %vm2082 = vcmp.ge.s32.totalorder %v2069, %v2080
    %vm2083 = vcmp.ge.s32.totalorder %v2070, %v2080
    %vm2084 = vcmp.ge.s32.totalorder %v2071, %v2080
    %vm2085 = vcmp.ge.s32.totalorder %v2072, %v2080
    %vm2086 = vcmp.ge.s32.totalorder %v2069, %v2081
    %vm2087 = vcmp.ge.s32.totalorder %v2070, %v2081
    %vm2088 = vcmp.ge.s32.totalorder %v2071, %v2081
    %vm2089 = vcmp.ge.s32.totalorder %v2072, %v2081
    %v2090 = vadd.s32 %v2080, 40
    %v2091 = vadd.s32 %v2081, 40
    %vm2092 = vcmp.lt.s32.totalorder %v2069, %v2090
    %vm2093 = vcmp.lt.s32.totalorder %v2070, %v2090
    %vm2094 = vcmp.lt.s32.totalorder %v2071, %v2090
    %vm2095 = vcmp.lt.s32.totalorder %v2072, %v2090
    %vm2096 = vcmp.lt.s32.totalorder %v2069, %v2091
    %vm2097 = vcmp.lt.s32.totalorder %v2070, %v2091
    %vm2098 = vcmp.lt.s32.totalorder %v2071, %v2091
    %vm2099 = vcmp.lt.s32.totalorder %v2072, %v2091
    %vm2100 = vmand %vm2082, %vm2092
    %vm2101 = vmand %vm2083, %vm2093
    %vm2102 = vmand %vm2084, %vm2094
    %vm2103 = vmand %vm2085, %vm2095
    %vm2104 = vmand %vm2086, %vm2096
    %vm2105 = vmand %vm2087, %vm2097
    %vm2106 = vmand %vm2088, %vm2098
    %vm2107 = vmand %vm2089, %vm2099
    %v2108 = vsel %vm2100, %v991, 0.0
    %v2109 = vsel %vm2101, %v993, 0.0
    %v2110 = vsel %vm2102, %v1895, 0.0
    %v2111 = vsel %vm2103, %v1897, 0.0
    %v2112 = vsel %vm2104, %v998, 0.0
    %v2113 = vsel %vm2105, %v1000, 0.0
    %v2114 = vsel %vm2106, %v1902, 0.0
    %v2115 = vsel %vm2107, %v1904, 0.0
    %vm2116 = vcmask 1041408
    %v2117 = vsel %vm2116, %v2112, 0.0
    %v2118 = vadd.f32 %v2108, %v2117
    %v2119 = vrot.slane %v2118, 4
    %v2120 = vadd.f32 %v2118, %v2119
    %v2121 = vrot.slane %v2120, 2
    %v2122 = vadd.f32 %v2120, %v2121
    %v2123 = vrot.slane %v2122, 1
    %v2124 = vadd.f32 %v2122, %v2123
    %v2125 = vsel %vm2116, %v2113, 0.0
    %v2126 = vadd.f32 %v2109, %v2125
    %v2127 = vrot.slane %v2126, 4
    %v2128 = vadd.f32 %v2126, %v2127
    %v2129 = vrot.slane %v2128, 2
    %v2130 = vadd.f32 %v2128, %v2129
    %v2131 = vrot.slane %v2130, 1
    %v2132 = vadd.f32 %v2130, %v2131
    %v2133 = vsel %vm2116, %v2114, 0.0
    %v2134 = vadd.f32 %v2110, %v2133
    %v2135 = vrot.slane %v2134, 4
    %v2136 = vadd.f32 %v2134, %v2135
    %v2137 = vrot.slane %v2136, 2
    %v2138 = vadd.f32 %v2136, %v2137
    %v2139 = vrot.slane %v2138, 1
    %v2140 = vadd.f32 %v2138, %v2139
    %v2141 = vsel %vm2116, %v2115, 0.0
    %v2142 = vadd.f32 %v2111, %v2141
    %v2143 = vrot.slane %v2142, 4
    %v2144 = vadd.f32 %v2142, %v2143
    %v2145 = vrot.slane %v2144, 2
    %v2146 = vadd.f32 %v2144, %v2145
    %v2147 = vrot.slane %v2146, 1
    %v2148 = vadd.f32 %v2146, %v2147
    %2150 = vset.pattern.permute.xlu0 0
    %2151 = vperm.xlu0 %2150, %v30
    %v2152 = vpop.permute.xlu0 %2151
    %2155 = vset.pattern.permute.xlu0 0
    %2156 = vperm.xlu0 %2155, %v31
    %v2157 = vpop.permute.xlu0 %2156
    %v2159 = vsel %vm2100, %v2152, 0.0
    %v2160 = vsel %vm2101, %v2152, 0.0
    %v2161 = vsel %vm2102, %v2152, 0.0
    %v2162 = vsel %vm2103, %v2152, 0.0
    %v2163 = vsel %vm2104, %v2157, 0.0
    %v2164 = vsel %vm2105, %v2157, 0.0
    %v2165 = vsel %vm2106, %v2157, 0.0
    %v2166 = vsel %vm2107, %v2157, 0.0
    %v2167 = vsel %vm2116, %v2163, 0.0
    %v2168 = vadd.f32 %v2159, %v2167
    %v2169 = vrot.slane %v2168, 4
    %v2170 = vadd.f32 %v2168, %v2169
    %v2171 = vrot.slane %v2170, 2
    %v2172 = vadd.f32 %v2170, %v2171
    %v2173 = vrot.slane %v2172, 1
    %v2174 = vadd.f32 %v2172, %v2173
    %v2175 = vsel %vm2116, %v2164, 0.0
    %v2176 = vadd.f32 %v2160, %v2175
    %v2177 = vrot.slane %v2176, 4
    %v2178 = vadd.f32 %v2176, %v2177
    %v2179 = vrot.slane %v2178, 2
    %v2180 = vadd.f32 %v2178, %v2179
    %v2181 = vrot.slane %v2180, 1
    %v2182 = vadd.f32 %v2180, %v2181
    %v2183 = vsel %vm2116, %v2165, 0.0
    %v2184 = vadd.f32 %v2161, %v2183
    %v2185 = vrot.slane %v2184, 4
    %v2186 = vadd.f32 %v2184, %v2185
    %v2187 = vrot.slane %v2186, 2
    %v2188 = vadd.f32 %v2186, %v2187
    %v2189 = vrot.slane %v2188, 1
    %v2190 = vadd.f32 %v2188, %v2189
    %v2191 = vsel %vm2116, %v2166, 0.0
    %v2192 = vadd.f32 %v2162, %v2191
    %v2193 = vrot.slane %v2192, 4
    %v2194 = vadd.f32 %v2192, %v2193
    %v2195 = vrot.slane %v2194, 2
    %v2196 = vadd.f32 %v2194, %v2195
    %v2197 = vrot.slane %v2196, 1
    %v2198 = vadd.f32 %v2196, %v2197
    %v2199 = vmul.f32 %v2174, 1600.0
    %v2200 = vmul.f32 %v2182, 1600.0
    %v2201 = vmul.f32 %v2190, 1600.0
    %v2202 = vmul.f32 %v2198, 1600.0
    %v2203 = vmul.f32 %v2124, 80.0
    %v2204 = vmul.f32 %v2132, 80.0
    %v2205 = vmul.f32 %v2140, 80.0
    %v2206 = vmul.f32 %v2148, 80.0
    %v2207 = vsub.f32 %v2199, %v2203
    %v2208 = vsub.f32 %v2200, %v2204
    %v2209 = vsub.f32 %v2201, %v2205
    %v2210 = vsub.f32 %v2202, %v2206
    %v2211 = vadd.f32 %v2207, %v1990
    %v2212 = vadd.f32 %v2208, %v2011
    %v2213 = vadd.f32 %v2209, %v2032
    %v2214 = vadd.f32 %v2210, %v2053
    %v2215 = vmul.f32 %v2124, 40.0
    %v2216 = vmul.f32 %v2132, 40.0
    %v2217 = vmul.f32 %v2140, 40.0
    %v2218 = vmul.f32 %v2148, 40.0
    %v2219 = vsub.f32 %v2215, %v1990
    %v2220 = vsub.f32 %v2216, %v2011
    %v2221 = vsub.f32 %v2217, %v2032
    %v2222 = vsub.f32 %v2218, %v2053
    %v2223 = vmul.f32 %v2219, %v2058
    %v2224 = vmul.f32 %v2220, %v2059
    %v2225 = vmul.f32 %v2221, %v2060
    %v2226 = vmul.f32 %v2222, %v2061
    %v2227 = vmax.f32 %v2211, 1e-30
    %v2228 = vmax.f32 %v2212, 1e-30
    %v2229 = vmax.f32 %v2213, 1e-30
    %v2230 = vmax.f32 %v2214, 1e-30
    %v2231 = vrsqrt.pop %v2227
    %v2232 = vrsqrt.pop %v2228
    %v2233 = vrsqrt.pop %v2229
    %v2234 = vrsqrt.pop %v2230
    %v2235 = vmul.f32 %v2223, %v2231
    %v2236 = vmul.f32 %v2224, %v2232
    %v2237 = vmul.f32 %v2225, %v2233
    %v2238 = vmul.f32 %v2226, %v2234
    %2240 = vset.pattern.permute.xlu0 0
    %2241 = vperm.xlu0 %2240, %v32
    %v2242 = vpop.permute.xlu0 %2241
    %2245 = vset.pattern.permute.xlu0 0
    %2246 = vperm.xlu0 %2245, %v33
    %v2247 = vpop.permute.xlu0 %2246
    %v2249 = vmul.f32 %v991, %v2242
    %v2250 = vmul.f32 %v993, %v2242
    %v2251 = vmul.f32 %v1895, %v2242
    %v2252 = vmul.f32 %v1897, %v2242
    %v2253 = vmul.f32 %v998, %v2247
    %v2254 = vmul.f32 %v1000, %v2247
    %v2255 = vmul.f32 %v1902, %v2247
    %v2256 = vmul.f32 %v1904, %v2247
    %v2257 = vmul.f32 %v2249, %v2058
    %v2258 = vmul.f32 %v2250, %v2059
    %v2259 = vmul.f32 %v2251, %v2060
    %v2260 = vmul.f32 %v2252, %v2061
    %v2261 = vmul.f32 %v2253, %v2058
    %v2262 = vmul.f32 %v2254, %v2059
    %v2263 = vmul.f32 %v2255, %v2060
    %v2264 = vmul.f32 %v2256, %v2061
    %v2265 = vsel %vm2100, %v2235, %v2257
    %v2266 = vsel %vm2101, %v2236, %v2258
    %v2267 = vsel %vm2102, %v2237, %v2259
    %v2268 = vsel %vm2103, %v2238, %v2260
    %v2269 = vsel %vm2104, %v2235, %v2261
    %v2270 = vsel %vm2105, %v2236, %v2262
    %v2271 = vsel %vm2106, %v2237, %v2263
    %v2272 = vsel %vm2107, %v2238, %v2264
    %v2273 = vmax.f32 %v2265, 1e-06
    %v2274 = vmax.f32 %v2266, 1e-06
    %v2275 = vmax.f32 %v2267, 1e-06
    %v2276 = vmax.f32 %v2268, 1e-06
    %v2277 = vmax.f32 %v2269, 1e-06
    %v2278 = vmax.f32 %v2270, 1e-06
    %v2279 = vmax.f32 %v2271, 1e-06
    %v2280 = vmax.f32 %v2272, 1e-06
    %v2281 = vstv %s26
    %v2282 = vmul.f32 %v2273, %v2281
    %v2283 = vmul.f32 %v2274, %v2281
    %v2284 = vmul.f32 %v2275, %v2281
    %v2285 = vmul.f32 %v2276, %v2281
    %v2286 = vmul.f32 %v2277, %v2281
    %v2287 = vmul.f32 %v2278, %v2281
    %v2288 = vmul.f32 %v2279, %v2281
    %v2289 = vmul.f32 %v2280, %v2281
    %v2290 = vstv %s27
    %v2291 = vadd.f32 %v2282, %v2290
    %v2292 = vadd.f32 %v2283, %v2290
    %v2293 = vadd.f32 %v2284, %v2290
    %v2294 = vadd.f32 %v2285, %v2290
    %v2295 = vadd.f32 %v2286, %v2290
    %v2296 = vadd.f32 %v2287, %v2290
    %v2297 = vadd.f32 %v2288, %v2290
    %v2298 = vadd.f32 %v2289, %v2290
    %v2299 = vsel %vm2116, %v2295, -inf
    %v2300 = vmax.f32 %v2291, %v2299
    %v2301 = vrot.slane %v2300, 4
    %v2302 = vmax.f32 %v2300, %v2301
    %v2303 = vrot.slane %v2302, 2
    %v2304 = vmax.f32 %v2302, %v2303
    %v2305 = vrot.slane %v2304, 1
    %v2306 = vmax.f32 %v2304, %v2305
    %v2307 = vsel %vm2116, %v2296, -inf
    %v2308 = vmax.f32 %v2292, %v2307
    %v2309 = vrot.slane %v2308, 4
    %v2310 = vmax.f32 %v2308, %v2309
    %v2311 = vrot.slane %v2310, 2
    %v2312 = vmax.f32 %v2310, %v2311
    %v2313 = vrot.slane %v2312, 1
    %v2314 = vmax.f32 %v2312, %v2313
    %v2315 = vsel %vm2116, %v2297, -inf
    %v2316 = vmax.f32 %v2293, %v2315
    %v2317 = vrot.slane %v2316, 4
    %v2318 = vmax.f32 %v2316, %v2317
    %v2319 = vrot.slane %v2318, 2
    %v2320 = vmax.f32 %v2318, %v2319
    %v2321 = vrot.slane %v2320, 1
    %v2322 = vmax.f32 %v2320, %v2321
    %v2323 = vsel %vm2116, %v2298, -inf
    %v2324 = vmax.f32 %v2294, %v2323
    %v2325 = vrot.slane %v2324, 4
    %v2326 = vmax.f32 %v2324, %v2325
    %v2327 = vrot.slane %v2326, 2
    %v2328 = vmax.f32 %v2326, %v2327
    %v2329 = vrot.slane %v2328, 1
    %v2330 = vmax.f32 %v2328, %v2329
    %v2331 = vsub.f32 %v2291, %v2306
    %v2332 = vsub.f32 %v2292, %v2314
    %v2333 = vsub.f32 %v2293, %v2322
    %v2334 = vsub.f32 %v2294, %v2330
    %v2335 = vsub.f32 %v2295, %v2306
    %v2336 = vsub.f32 %v2296, %v2314
    %v2337 = vsub.f32 %v2297, %v2322
    %v2338 = vsub.f32 %v2298, %v2330
    %v2339 = vmul.f32 %v2331, 1.442695
    %v2340 = vpow.pop %v2339
    %v2341 = vmul.f32 %v2332, 1.442695
    %v2342 = vpow.pop %v2341
    %v2343 = vmul.f32 %v2333, 1.442695
    %v2344 = vpow.pop %v2343
    %v2345 = vmul.f32 %v2334, 1.442695
    %v2346 = vpow.pop %v2345
    %v2347 = vmul.f32 %v2335, 1.442695
    %v2348 = vpow.pop %v2347
    %v2349 = vmul.f32 %v2336, 1.442695
    %v2350 = vpow.pop %v2349
    %v2351 = vmul.f32 %v2337, 1.442695
    %v2352 = vpow.pop %v2351
    %v2353 = vmul.f32 %v2338, 1.442695
    %v2354 = vpow.pop %v2353
    %v2355 = vsel %vm2116, %v2348, 0.0
    %v2356 = vadd.f32 %v2340, %v2355
    %v2357 = vrot.slane %v2356, 4
    %v2358 = vadd.f32 %v2356, %v2357
    %v2359 = vrot.slane %v2358, 2
    %v2360 = vadd.f32 %v2358, %v2359
    %v2361 = vrot.slane %v2360, 1
    %v2362 = vadd.f32 %v2360, %v2361
    %v2363 = vsel %vm2116, %v2350, 0.0
    %v2364 = vadd.f32 %v2342, %v2363
    %v2365 = vrot.slane %v2364, 4
    %v2366 = vadd.f32 %v2364, %v2365
    %v2367 = vrot.slane %v2366, 2
    %v2368 = vadd.f32 %v2366, %v2367
    %v2369 = vrot.slane %v2368, 1
    %v2370 = vadd.f32 %v2368, %v2369
    %v2371 = vsel %vm2116, %v2352, 0.0
    %v2372 = vadd.f32 %v2344, %v2371
    %v2373 = vrot.slane %v2372, 4
    %v2374 = vadd.f32 %v2372, %v2373
    %v2375 = vrot.slane %v2374, 2
    %v2376 = vadd.f32 %v2374, %v2375
    %v2377 = vrot.slane %v2376, 1
    %v2378 = vadd.f32 %v2376, %v2377
    %v2379 = vsel %vm2116, %v2354, 0.0
    %v2380 = vadd.f32 %v2346, %v2379
    %v2381 = vrot.slane %v2380, 4
    %v2382 = vadd.f32 %v2380, %v2381
    %v2383 = vrot.slane %v2382, 2
    %v2384 = vadd.f32 %v2382, %v2383
    %v2385 = vrot.slane %v2384, 1
    %v2386 = vadd.f32 %v2384, %v2385
    %v2387 = vlog2.pop %v2362
    %v2388 = vmul.f32 %v2387, 0.6931472
    %v2389 = vlog2.pop %v2370
    %v2390 = vmul.f32 %v2389, 0.6931472
    %v2391 = vlog2.pop %v2378
    %v2392 = vmul.f32 %v2391, 0.6931472
    %v2393 = vlog2.pop %v2386
    %v2394 = vmul.f32 %v2393, 0.6931472
    %v2395 = vadd.f32 %v2388, %v2306
    %v2396 = vadd.f32 %v2390, %v2314
    %v2397 = vadd.f32 %v2392, %v2322
    %v2398 = vadd.f32 %v2394, %v2330
    %v2399 = vmax.f32 %v2235, 1e-06
    %v2400 = vmax.f32 %v2236, 1e-06
    %v2401 = vmax.f32 %v2237, 1e-06
    %v2402 = vmax.f32 %v2238, 1e-06
    %v2403 = vmul.f32 %v2399, %v2281
    %v2404 = vmul.f32 %v2400, %v2281
    %v2405 = vmul.f32 %v2401, %v2281
    %v2406 = vmul.f32 %v2402, %v2281
    %v2407 = vadd.f32 %v2403, %v2290
    %v2408 = vadd.f32 %v2404, %v2290
    %v2409 = vadd.f32 %v2405, %v2290
    %v2410 = vadd.f32 %v2406, %v2290
    %v2411 = vsub.f32 %v2395, %v2407
    %v2412 = vsub.f32 %v2396, %v2408
    %v2413 = vsub.f32 %v2397, %v2409
    %v2414 = vsub.f32 %v2398, %v2410
    %v2415 = vsel %vm2073, %v2411, 0.0
    %v2416 = vsel %vm2074, %v2412, 0.0
    %v2417 = vsel %vm2075, %v2413, 0.0
    %v2418 = vsel %vm2076, %v2414, 0.0
    %vm2419 = vcmask 1040384
    %v2420 = vsel %vm2419, %v2415, 0.0
    %v2421 = vsel %vm2419, %v2416, 0.0
    %v2422 = vadd.f32 %v2420, %v2421
    %v2423 = vsel %vm2419, %v2417, 0.0
    %v2424 = vadd.f32 %v2422, %v2423
    %v2425 = vsel %vm2419, %v2418, 0.0
    %v2426 = vadd.f32 %v2424, %v2425
    %2427 = vadd.xlane.f32.xlu0 %v2426
    %v2428 = vpop.xlane.xlu0 %2427
    %v2429 = vrot.slane %v2428, 4
    %v2430 = vadd.f32 %v2428, %v2429
    %v2431 = vrot.slane %v2430, 2
    %v2432 = vadd.f32 %v2430, %v2431
    %v2433 = vrot.slane %v2432, 1
    %v2434 = vadd.f32 %v2432, %v2433
    %s2435 = vtos %v2434
    %s2436 = scalar_lea.smem [#allocation4], 0
    %2437 = sst [smem:[%s2436]] %s2435
    // Predicated region
    $region26: #{ge2e_loss.1} parent=1 // pred_check
      _
    $region27: #{ge2e_loss.1} parent=1 // pred_check_branch
      %2439 = sbr.rel (0) target = $region29
    $region28: #{ge2e_loss.1} parent=1 // pred_region
      %s2441 = ssub.s32 16, 16
      %2442 = vsyncadd [#allocation5], %s2441
      %2445 = dma.smem_to_hbm [#allocation4], 16, %s6, [#allocation5]
    $region29: #{ge2e_loss.1} parent=1 // pred_fallthru
      _
    // Predicated region
    $region30: #{ge2e_loss.1} parent=1 // pred_check
      _
    $region31: #{ge2e_loss.1} parent=1 // pred_check_branch
      %2447 = sbr.rel (0) target = $region33
    $region32: #{ge2e_loss.1} parent=1 // pred_region
      %2448 = dma.done [#allocation5], 16
    $region33: #{ge2e_loss.1} parent=1 // pred_fallthru
      _
    %2449 = sfence
    %2450 = vsyncpa [#allocation5], 1

</llo_original>
